<compile_context>
chip_gen: v7x
topology: tpu7x:2x2x1
jax: 0.10.0
libtpu: 0.0.40
codegen_flags: <defaults>
</compile_context>

<pallas_src>
import jax
import jax.numpy as jnp
from jax.experimental import pallas as pl
from jax.experimental.pallas import tpu as pltpu


def _gru_model_kernel(
    x_ref,                                   # (S, Bblk, 4) time-major input block, f32
    w1, b1, w2, b2, w3, b3,                  # embed MLP: 4->16->32->E (weights bf16)
    wi, bi, wh, bhn,                         # fused GRU: (E,3H),(1,3H),(H,3H),(1,H)
    wf1, bf1, wf2, bf2,                      # fc MLP: H->128->Cpad (lane-padded)
    out_ref,                                 # (Bblk, S*Cpad) batch-major lane-dense slab
):
    S, Bb, _ = x_ref.shape
    f32 = jnp.float32

    # Load parameters once (small; stay VMEM/vreg resident across the whole body).
    w1_v, b1_v = w1[...], b1[...]
    w2_v, b2_v = w2[...], b2[...]
    w3_v, b3_v = w3[...], b3[...]
    wi_v, bi_v = wi[...], bi[...]
    wh_v = wh[...]
    bhn_v = bhn[...]
    wf1_v, bf1_v = wf1[...], bf1[...]
    wf2_v, bf2_v = wf2[...], bf2[...]

    H = wh_v.shape[0]
    cdt = wi_v.dtype                          # MXU operand dtype (bf16 by default)

    # ----- embed MLP over all S*Bb rows in one shot (time-major rows) -----
    # Reshape merges the (S, Bb) leading dims; with Bb % 8 == 0 this is a no-op relayout.
    x = x_ref[...].reshape(S * Bb, 4).astype(cdt)
    h1 = jnp.maximum(jnp.dot(x, w1_v, preferred_element_type=f32) + b1_v, 0.0)
    h2 = jnp.maximum(jnp.dot(h1.astype(cdt), w2_v, preferred_element_type=f32) + b2_v, 0.0)
    e = jnp.dot(h2.astype(cdt), w3_v, preferred_element_type=f32) + b3_v       # (S*Bb, E)

    # ----- fused input-side gate pre-activations for ALL timesteps -----
    # bi already holds [bir+bhr | biz+bhz | bin] (recurrent r/z biases folded in).
    gx = jnp.dot(e.astype(cdt), wi_v, preferred_element_type=f32) + bi_v       # (S*Bb, 3H)

    # ----- GRU recurrence, fully unrolled over time (S is small) -----
    h = jnp.zeros((Bb, H), f32)
    hs = []
    for t in range(S):
        gx_t = gx[t * Bb:(t + 1) * Bb, :]                                      # (Bb, 3H)
        gh = jnp.dot(h.astype(cdt), wh_v, preferred_element_type=f32)          # (Bb, 3H)
        s_rz = gx_t[:, :2 * H] + gh[:, :2 * H]
        rz = 0.5 + 0.5 * jnp.tanh(0.5 * s_rz)      # sigmoid via tanh: 1 EUP op, not 2
        r = rz[:, :H]
        z = rz[:, H:]
        n = jnp.tanh(gx_t[:, 2 * H:] + r * (gh[:, 2 * H:] + bhn_v))
        h = (1.0 - z) * n + z * h
        hs.append(h)

    # ----- fc MLP over all S*Bb rows (time-major), lane-dense Cpad-wide output -----
    g = jnp.concatenate(hs, axis=0).astype(cdt)                                # (S*Bb, H)
    f1 = jnp.maximum(jnp.dot(g, wf1_v, preferred_element_type=f32) + bf1_v, 0.0)
    o = jnp.dot(f1.astype(cdt), wf2_v, preferred_element_type=f32) + bf2_v     # (S*Bb, Cpad)

    # Reorder time-major -> batch-major by concatenating the S timestep slabs along the
    # lane axis (each piece is a multiple of 128 lanes wide -> pure vreg placement,
    # no transpose, fully unmasked stores):
    #   out row b, lanes [t*Cpad:(t+1)*Cpad] = o[t*Bb + b, :]
    out_ref[...] = jnp.concatenate(
        [o[t * Bb:(t + 1) * Bb, :] for t in range(S)], axis=1)                 # (Bb, S*Cpad)


def _pick_block_b(B):
    """Largest multiple-of-8 divisor of B that is <= 256, preferring >= 2 batch blocks
    (so v7x can shard the parallel grid axis across its 2 TensorCores).  Falls back to
    the whole batch for small / odd B."""
    upper = min(B // 2, 256) if B >= 16 else 0
    best = None
    bb = 8
    while bb <= upper:
        if B % bb == 0:
            best = bb
        bb += 8
    return best if best is not None else B


def gru_model_forward(x, params, *, block_b=None, mxu_dtype=jnp.bfloat16):
    """x: (B, S, 4) float32. Returns (B, S, num_classes) float32."""
    B, S, _ = x.shape
    C = params["wf2"].shape[1]
    Cpad = ((C + 127) // 128) * 128          # lane-dense output width

    if block_b is None:
        block_b = _pick_block_b(B)
    assert B % block_b == 0, "B must be a multiple of block_b"
    assert block_b % 8 == 0 or block_b == B, (
        "block_b must be a multiple of 8 (sublane tile) or equal to B")
    nb = B // block_b

    f32 = jnp.float32
    cdt = mxu_dtype

    # Fuse GRU gate parameters (torch gate order r, z, n); fold the recurrent r/z biases
    # into the input-side biases (only bhn stays separate, it sits inside r*(...)).
    wi = jnp.concatenate([params["wir"], params["wiz"], params["win"]], axis=1).astype(cdt)
    bi = jnp.concatenate([params["bir"] + params["bhr"],
                          params["biz"] + params["bhz"],
                          params["bin"]], axis=1).astype(f32)
    wh = jnp.concatenate([params["whr"], params["whz"], params["whn"]], axis=1).astype(cdt)
    bhn = params["bhn"].astype(f32)

    # Lane-pad fc2 to a 128-multiple so output stores are unmasked; padded cols are 0
    # and get sliced off below.
    wf2 = jnp.pad(params["wf2"], ((0, 0), (0, Cpad - C))).astype(cdt)
    bf2 = jnp.pad(params["bf2"], ((0, 0), (0, Cpad - C))).astype(f32)

    param_vals = [
        params["w1"].astype(cdt), params["b1"].astype(f32),
        params["w2"].astype(cdt), params["b2"].astype(f32),
        params["w3"].astype(cdt), params["b3"].astype(f32),
        wi, bi, wh, bhn,
        params["wf1"].astype(cdt), params["bf1"].astype(f32),
        wf2, bf2,
    ]

    # Time-major input so per-timestep slices in the kernel are contiguous row blocks.
    # (Cheap: x is only 4 features wide.  The big padded output needs NO transpose.)
    x_tm = jnp.transpose(x, (1, 0, 2)).astype(f32)    # (S, B, 4)

    def full_spec(a):
        nd = a.ndim
        return pl.BlockSpec(a.shape, lambda b, _nd=nd: (0,) * _nd)

    in_specs = [pl.BlockSpec((S, block_b, 4), lambda b: (0, b, 0))]
    in_specs += [full_spec(a) for a in param_vals]
    # Batch-major, lane-dense (S*Cpad wide) output slab per batch block.
    out_spec = pl.BlockSpec((block_b, S * Cpad), lambda b: (b, 0))

    fn = pl.pallas_call(
        _gru_model_kernel,
        out_shape=jax.ShapeDtypeStruct((B, S * Cpad), f32),
        grid_spec=pltpu.PrefetchScalarGridSpec(
            num_scalar_prefetch=0,
            grid=(nb,),
            in_specs=in_specs,
            out_specs=out_spec,
        ),
        compiler_params=pltpu.CompilerParams(
            dimension_semantics=("parallel",)),       # batch blocks are independent
    )
    out2d = fn(x_tm, *param_vals)                     # (B, S*Cpad)
    # Row-major (B, S*Cpad) == (B, S, Cpad): reshape is free; slice drops the padding.
    return out2d.reshape(B, S, Cpad)[:, :, :C]


def init_params(key, num_classes=10, hidden_size=64, embed_size=64):
    """Deterministic parameter init (uniform, PyTorch-ish fan-in scaling).

    All weights are stored in (in_features, out_features) layout; biases as (1, N).
    """
    def uni(k, shape, fan_in):
        bound = 1.0 / jnp.sqrt(jnp.float32(fan_in))
        return jax.random.uniform(k, shape, jnp.float32, -bound, bound)

    keys = jax.random.split(key, 32)
    ki = iter(keys)
    H, E = hidden_size, embed_size
    p = {}
    # embed MLP
    p["w1"] = uni(next(ki), (4, 16), 4);    p["b1"] = uni(next(ki), (1, 16), 4)
    p["w2"] = uni(next(ki), (16, 32), 16);  p["b2"] = uni(next(ki), (1, 32), 16)
    p["w3"] = uni(next(ki), (32, E), 32);   p["b3"] = uni(next(ki), (1, E), 32)
    # GRU (gate order r, z, n like torch)
    p["wir"] = uni(next(ki), (E, H), H); p["wiz"] = uni(next(ki), (E, H), H)
    p["win"] = uni(next(ki), (E, H), H)
    p["whr"] = uni(next(ki), (H, H), H); p["whz"] = uni(next(ki), (H, H), H)
    p["whn"] = uni(next(ki), (H, H), H)
    p["bir"] = uni(next(ki), (1, H), H); p["biz"] = uni(next(ki), (1, H), H)
    p["bin"] = uni(next(ki), (1, H), H)
    p["bhr"] = uni(next(ki), (1, H), H); p["bhz"] = uni(next(ki), (1, H), H)
    p["bhn"] = uni(next(ki), (1, H), H)
    # fc MLP
    p["wf1"] = uni(next(ki), (H, 128), H);   p["bf1"] = uni(next(ki), (1, 128), H)
    p["wf2"] = uni(next(ki), (128, num_classes), 128)
    p["bf2"] = uni(next(ki), (1, num_classes), 128)
    return p


def reference_forward(x, p):
    """Pure-JAX f32 reference (mirrors torch semantics) for the correctness check."""
    h1 = jnp.maximum(x @ p["w1"] + p["b1"], 0.0)
    h2 = jnp.maximum(h1 @ p["w2"] + p["b2"], 0.0)
    e = h2 @ p["w3"] + p["b3"]                      # (B, S, E)

    B, S, _ = e.shape
    H = p["whr"].shape[0]

    def step(h, e_t):
        r = jax.nn.sigmoid(e_t @ p["wir"] + p["bir"] + h @ p["whr"] + p["bhr"])
        z = jax.nn.sigmoid(e_t @ p["wiz"] + p["biz"] + h @ p["whz"] + p["bhz"])
        n = jnp.tanh(e_t @ p["win"] + p["bin"] + r * (h @ p["whn"] + p["bhn"]))
        h_new = (1.0 - z) * n + z * h
        return h_new, h_new

    h0 = jnp.zeros((B, H), jnp.float32)
    _, hs = jax.lax.scan(step, h0, jnp.swapaxes(e, 0, 1))   # (S, B, H)
    g = jnp.swapaxes(hs, 0, 1)                              # (B, S, H)

    f1 = jnp.maximum(g @ p["wf1"] + p["bf1"], 0.0)
    return f1 @ p["wf2"] + p["bf2"]


if __name__ == "__main__":
    B, S, num_classes = 2, 8, 10
    hidden_size = embed_size = 64

    key = jax.random.PRNGKey(0)
    kx, kp, kx2 = jax.random.split(key, 3)
    params = init_params(kp, num_classes=num_classes,
                         hidden_size=hidden_size, embed_size=embed_size)

    # Primary small-shape check (single batch block).  Tolerance is sized for bf16 MXU
    # operands with f32 accumulation.
    x = jax.random.normal(kx, (B, S, 4), jnp.float32)
    out = jax.block_until_ready(gru_model_forward(x, params))
    ref = jax.block_until_ready(reference_forward(x, params))
    assert out.shape == (B, S, num_classes)
    err = float(jnp.max(jnp.abs(out - ref)))
    assert jnp.allclose(out, ref, rtol=2e-2, atol=2e-2), f"max abs err {err}"

    # Multi-block check: exercises the batch-blocked grid (nb = 2, megacore-friendly).
    B2 = 16
    x2 = jax.random.normal(kx2, (B2, S, 4), jnp.float32)
    out2 = jax.block_until_ready(gru_model_forward(x2, params))
    ref2 = jax.block_until_ready(reference_forward(x2, params))
    assert out2.shape == (B2, S, num_classes)
    err2 = float(jnp.max(jnp.abs(out2 - ref2)))
    assert jnp.allclose(out2, ref2, rtol=2e-2, atol=2e-2), f"max abs err {err2}"

    print("KERNEL_OK")
</pallas_src>

<mosaic_0001>
module attributes {stable_mosaic.version = 11 : i64} {
  func.func @_gru_model_kernel(%arg0: i32, %arg1: memref<8x2x4xf32, #tpu.memory_space<vmem>>, %arg2: memref<4x16xbf16, #tpu.memory_space<vmem>>, %arg3: memref<1x16xf32, #tpu.memory_space<vmem>>, %arg4: memref<16x32xbf16, #tpu.memory_space<vmem>>, %arg5: memref<1x32xf32, #tpu.memory_space<vmem>>, %arg6: memref<32x64xbf16, #tpu.memory_space<vmem>>, %arg7: memref<1x64xf32, #tpu.memory_space<vmem>>, %arg8: memref<64x192xbf16, #tpu.memory_space<vmem>>, %arg9: memref<1x192xf32, #tpu.memory_space<vmem>>, %arg10: memref<64x192xbf16, #tpu.memory_space<vmem>>, %arg11: memref<1x64xf32, #tpu.memory_space<vmem>>, %arg12: memref<64x128xbf16, #tpu.memory_space<vmem>>, %arg13: memref<1x128xf32, #tpu.memory_space<vmem>>, %arg14: memref<128x128xbf16, #tpu.memory_space<vmem>>, %arg15: memref<1x128xf32, #tpu.memory_space<vmem>>, %arg16: memref<2x1024xf32, #tpu.memory_space<vmem>>) attributes {dimension_semantics = [#tpu.dimension_semantics<parallel>], iteration_bounds = array<i64: 1>, scalar_prefetch = 0 : i64, scratch_operands = 0 : i64, tpu.core_type = #tpu.core_type<tc>, window_params = [{transform_indices = @transform_0, window_bounds = array<i64: 8, 2, 4>}, {pipeline_mode = #tpu.pipeline_mode<synchronous>, transform_indices = @transform_1, window_bounds = array<i64: 4, 16>}, {pipeline_mode = #tpu.pipeline_mode<synchronous>, transform_indices = @transform_2, window_bounds = array<i64: 1, 16>}, {pipeline_mode = #tpu.pipeline_mode<synchronous>, transform_indices = @transform_3, window_bounds = array<i64: 16, 32>}, {pipeline_mode = #tpu.pipeline_mode<synchronous>, transform_indices = @transform_4, window_bounds = array<i64: 1, 32>}, {pipeline_mode = #tpu.pipeline_mode<synchronous>, transform_indices = @transform_5, window_bounds = array<i64: 32, 64>}, {pipeline_mode = #tpu.pipeline_mode<synchronous>, transform_indices = @transform_6, window_bounds = array<i64: 1, 64>}, {pipeline_mode = #tpu.pipeline_mode<synchronous>, transform_indices = @transform_7, window_bounds = array<i64: 64, 192>}, {pipeline_mode = #tpu.pipeline_mode<synchronous>, transform_indices = @transform_8, window_bounds = array<i64: 1, 192>}, {pipeline_mode = #tpu.pipeline_mode<synchronous>, transform_indices = @transform_9, window_bounds = array<i64: 64, 192>}, {pipeline_mode = #tpu.pipeline_mode<synchronous>, transform_indices = @transform_10, window_bounds = array<i64: 1, 64>}, {pipeline_mode = #tpu.pipeline_mode<synchronous>, transform_indices = @transform_11, window_bounds = array<i64: 64, 128>}, {pipeline_mode = #tpu.pipeline_mode<synchronous>, transform_indices = @transform_12, window_bounds = array<i64: 1, 128>}, {pipeline_mode = #tpu.pipeline_mode<synchronous>, transform_indices = @transform_13, window_bounds = array<i64: 128, 128>}, {pipeline_mode = #tpu.pipeline_mode<synchronous>, transform_indices = @transform_14, window_bounds = array<i64: 1, 128>}, {transform_indices = @transform_15, window_bounds = array<i64: 2, 1024>}]} {
    %c0 = arith.constant 0 : index
    %c0_0 = arith.constant 0 : index
    %0 = vector.load %arg2[%c0, %c0_0] : memref<4x16xbf16, #tpu.memory_space<vmem>>, vector<4x16xbf16>
    %c0_1 = arith.constant 0 : index
    %c0_2 = arith.constant 0 : index
    %1 = vector.load %arg3[%c0_1, %c0_2] : memref<1x16xf32, #tpu.memory_space<vmem>>, vector<1x16xf32>
    %c0_3 = arith.constant 0 : index
    %c0_4 = arith.constant 0 : index
    %2 = vector.load %arg4[%c0_3, %c0_4] : memref<16x32xbf16, #tpu.memory_space<vmem>>, vector<16x32xbf16>
    %c0_5 = arith.constant 0 : index
    %c0_6 = arith.constant 0 : index
    %3 = vector.load %arg5[%c0_5, %c0_6] : memref<1x32xf32, #tpu.memory_space<vmem>>, vector<1x32xf32>
    %c0_7 = arith.constant 0 : index
    %c0_8 = arith.constant 0 : index
    %4 = vector.load %arg6[%c0_7, %c0_8] : memref<32x64xbf16, #tpu.memory_space<vmem>>, vector<32x64xbf16>
    %c0_9 = arith.constant 0 : index
    %c0_10 = arith.constant 0 : index
    %5 = vector.load %arg7[%c0_9, %c0_10] : memref<1x64xf32, #tpu.memory_space<vmem>>, vector<1x64xf32>
    %c0_11 = arith.constant 0 : index
    %c0_12 = arith.constant 0 : index
    %6 = vector.load %arg8[%c0_11, %c0_12] : memref<64x192xbf16, #tpu.memory_space<vmem>>, vector<64x192xbf16>
    %c0_13 = arith.constant 0 : index
    %c0_14 = arith.constant 0 : index
    %7 = vector.load %arg9[%c0_13, %c0_14] : memref<1x192xf32, #tpu.memory_space<vmem>>, vector<1x192xf32>
    %c0_15 = arith.constant 0 : index
    %c0_16 = arith.constant 0 : index
    %8 = vector.load %arg10[%c0_15, %c0_16] : memref<64x192xbf16, #tpu.memory_space<vmem>>, vector<64x192xbf16>
    %c0_17 = arith.constant 0 : index
    %c0_18 = arith.constant 0 : index
    %9 = vector.load %arg11[%c0_17, %c0_18] : memref<1x64xf32, #tpu.memory_space<vmem>>, vector<1x64xf32>
    %c0_19 = arith.constant 0 : index
    %c0_20 = arith.constant 0 : index
    %10 = vector.load %arg12[%c0_19, %c0_20] : memref<64x128xbf16, #tpu.memory_space<vmem>>, vector<64x128xbf16>
    %c0_21 = arith.constant 0 : index
    %c0_22 = arith.constant 0 : index
    %11 = vector.load %arg13[%c0_21, %c0_22] : memref<1x128xf32, #tpu.memory_space<vmem>>, vector<1x128xf32>
    %c0_23 = arith.constant 0 : index
    %c0_24 = arith.constant 0 : index
    %12 = vector.load %arg14[%c0_23, %c0_24] : memref<128x128xbf16, #tpu.memory_space<vmem>>, vector<128x128xbf16>
    %c0_25 = arith.constant 0 : index
    %c0_26 = arith.constant 0 : index
    %13 = vector.load %arg15[%c0_25, %c0_26] : memref<1x128xf32, #tpu.memory_space<vmem>>, vector<1x128xf32>
    %c0_27 = arith.constant 0 : index
    %c0_28 = arith.constant 0 : index
    %c0_29 = arith.constant 0 : index
    %14 = vector.load %arg1[%c0_27, %c0_28, %c0_29] : memref<8x2x4xf32, #tpu.memory_space<vmem>>, vector<8x2x4xf32>
    %15 = vector.shape_cast %14 : vector<8x2x4xf32> to vector<16x4xf32>
    %16 = arith.truncf %15 : vector<16x4xf32> to vector<16x4xbf16>
    %cst = arith.constant dense<0.000000e+00> : vector<16x16xf32>
    %17 = tpu.matmul %16, %0, %cst {dimension_numbers = #tpu.dot_dimension_numbers<[1], [0], [0], [1], [0, 0, 1, 1], [], []>} : vector<16x4xbf16>, vector<4x16xbf16>, vector<16x16xf32> -> vector<16x16xf32>
    %18 = vector.broadcast %1 : vector<1x16xf32> to vector<16x16xf32>
    %19 = arith.addf %17, %18 : vector<16x16xf32>
    %cst_30 = arith.constant 0.000000e+00 : f32
    %20 = vector.broadcast %cst_30 : f32 to vector<16x16xf32>
    %21 = arith.maximumf %19, %20 : vector<16x16xf32>
    %22 = arith.truncf %21 : vector<16x16xf32> to vector<16x16xbf16>
    %cst_31 = arith.constant dense<0.000000e+00> : vector<16x32xf32>
    %23 = tpu.matmul %22, %2, %cst_31 {dimension_numbers = #tpu.dot_dimension_numbers<[1], [0], [0], [1], [0, 0, 1, 1], [], []>} : vector<16x16xbf16>, vector<16x32xbf16>, vector<16x32xf32> -> vector<16x32xf32>
    %24 = vector.broadcast %3 : vector<1x32xf32> to vector<16x32xf32>
    %25 = arith.addf %23, %24 : vector<16x32xf32>
    %cst_32 = arith.constant 0.000000e+00 : f32
    %26 = vector.broadcast %cst_32 : f32 to vector<16x32xf32>
    %27 = arith.maximumf %25, %26 : vector<16x32xf32>
    %28 = arith.truncf %27 : vector<16x32xf32> to vector<16x32xbf16>
    %cst_33 = arith.constant dense<0.000000e+00> : vector<16x64xf32>
    %29 = tpu.matmul %28, %4, %cst_33 {dimension_numbers = #tpu.dot_dimension_numbers<[1], [0], [0], [1], [0, 0, 1, 1], [], []>} : vector<16x32xbf16>, vector<32x64xbf16>, vector<16x64xf32> -> vector<16x64xf32>
    %30 = vector.broadcast %5 : vector<1x64xf32> to vector<16x64xf32>
    %31 = arith.addf %29, %30 : vector<16x64xf32>
    %32 = arith.truncf %31 : vector<16x64xf32> to vector<16x64xbf16>
    %cst_34 = arith.constant dense<0.000000e+00> : vector<16x192xf32>
    %33 = tpu.matmul %32, %6, %cst_34 {dimension_numbers = #tpu.dot_dimension_numbers<[1], [0], [0], [1], [0, 0, 1, 1], [], []>} : vector<16x64xbf16>, vector<64x192xbf16>, vector<16x192xf32> -> vector<16x192xf32>
    %34 = vector.broadcast %7 : vector<1x192xf32> to vector<16x192xf32>
    %35 = arith.addf %33, %34 : vector<16x192xf32>
    %cst_35 = arith.constant 0.000000e+00 : f32
    %36 = vector.broadcast %cst_35 : f32 to vector<2x64xf32>
    %37 = vector.extract_strided_slice %35 {offsets = [0, 0], sizes = [2, 192], strides = [1, 1]} : vector<16x192xf32> to vector<2x192xf32>
    %38 = arith.truncf %36 : vector<2x64xf32> to vector<2x64xbf16>
    %cst_36 = arith.constant dense<0.000000e+00> : vector<2x192xf32>
    %39 = tpu.matmul %38, %8, %cst_36 {dimension_numbers = #tpu.dot_dimension_numbers<[1], [0], [0], [1], [0, 0, 1, 1], [], []>} : vector<2x64xbf16>, vector<64x192xbf16>, vector<2x192xf32> -> vector<2x192xf32>
    %40 = vector.extract_strided_slice %37 {offsets = [0, 0], sizes = [2, 128], strides = [1, 1]} : vector<2x192xf32> to vector<2x128xf32>
    %41 = vector.extract_strided_slice %39 {offsets = [0, 0], sizes = [2, 128], strides = [1, 1]} : vector<2x192xf32> to vector<2x128xf32>
    %42 = arith.addf %40, %41 : vector<2x128xf32>
    %cst_37 = arith.constant 5.000000e-01 : f32
    %43 = vector.broadcast %cst_37 : f32 to vector<2x128xf32>
    %44 = arith.mulf %43, %42 : vector<2x128xf32>
    %45 = math.tanh %44 : vector<2x128xf32>
    %cst_38 = arith.constant 5.000000e-01 : f32
    %46 = vector.broadcast %cst_38 : f32 to vector<2x128xf32>
    %47 = arith.mulf %46, %45 : vector<2x128xf32>
    %cst_39 = arith.constant 5.000000e-01 : f32
    %48 = vector.broadcast %cst_39 : f32 to vector<2x128xf32>
    %49 = arith.addf %48, %47 : vector<2x128xf32>
    %50 = vector.extract_strided_slice %49 {offsets = [0, 0], sizes = [2, 64], strides = [1, 1]} : vector<2x128xf32> to vector<2x64xf32>
    %51 = vector.extract_strided_slice %49 {offsets = [0, 64], sizes = [2, 64], strides = [1, 1]} : vector<2x128xf32> to vector<2x64xf32>
    %52 = vector.extract_strided_slice %37 {offsets = [0, 128], sizes = [2, 64], strides = [1, 1]} : vector<2x192xf32> to vector<2x64xf32>
    %53 = vector.extract_strided_slice %39 {offsets = [0, 128], sizes = [2, 64], strides = [1, 1]} : vector<2x192xf32> to vector<2x64xf32>
    %54 = vector.broadcast %9 : vector<1x64xf32> to vector<2x64xf32>
    %55 = arith.addf %53, %54 : vector<2x64xf32>
    %56 = arith.mulf %50, %55 : vector<2x64xf32>
    %57 = arith.addf %52, %56 : vector<2x64xf32>
    %58 = math.tanh %57 : vector<2x64xf32>
    %cst_40 = arith.constant 1.000000e+00 : f32
    %59 = vector.broadcast %cst_40 : f32 to vector<2x64xf32>
    %60 = arith.subf %59, %51 : vector<2x64xf32>
    %61 = arith.mulf %60, %58 : vector<2x64xf32>
    %62 = arith.mulf %51, %36 : vector<2x64xf32>
    %63 = arith.addf %61, %62 : vector<2x64xf32>
    %64 = vector.extract_strided_slice %35 {offsets = [2, 0], sizes = [2, 192], strides = [1, 1]} : vector<16x192xf32> to vector<2x192xf32>
    %65 = arith.truncf %63 : vector<2x64xf32> to vector<2x64xbf16>
    %cst_41 = arith.constant dense<0.000000e+00> : vector<2x192xf32>
    %66 = tpu.matmul %65, %8, %cst_41 {dimension_numbers = #tpu.dot_dimension_numbers<[1], [0], [0], [1], [0, 0, 1, 1], [], []>} : vector<2x64xbf16>, vector<64x192xbf16>, vector<2x192xf32> -> vector<2x192xf32>
    %67 = vector.extract_strided_slice %64 {offsets = [0, 0], sizes = [2, 128], strides = [1, 1]} : vector<2x192xf32> to vector<2x128xf32>
    %68 = vector.extract_strided_slice %66 {offsets = [0, 0], sizes = [2, 128], strides = [1, 1]} : vector<2x192xf32> to vector<2x128xf32>
    %69 = arith.addf %67, %68 : vector<2x128xf32>
    %cst_42 = arith.constant 5.000000e-01 : f32
    %70 = vector.broadcast %cst_42 : f32 to vector<2x128xf32>
    %71 = arith.mulf %70, %69 : vector<2x128xf32>
    %72 = math.tanh %71 : vector<2x128xf32>
    %cst_43 = arith.constant 5.000000e-01 : f32
    %73 = vector.broadcast %cst_43 : f32 to vector<2x128xf32>
    %74 = arith.mulf %73, %72 : vector<2x128xf32>
    %cst_44 = arith.constant 5.000000e-01 : f32
    %75 = vector.broadcast %cst_44 : f32 to vector<2x128xf32>
    %76 = arith.addf %75, %74 : vector<2x128xf32>
    %77 = vector.extract_strided_slice %76 {offsets = [0, 0], sizes = [2, 64], strides = [1, 1]} : vector<2x128xf32> to vector<2x64xf32>
    %78 = vector.extract_strided_slice %76 {offsets = [0, 64], sizes = [2, 64], strides = [1, 1]} : vector<2x128xf32> to vector<2x64xf32>
    %79 = vector.extract_strided_slice %64 {offsets = [0, 128], sizes = [2, 64], strides = [1, 1]} : vector<2x192xf32> to vector<2x64xf32>
    %80 = vector.extract_strided_slice %66 {offsets = [0, 128], sizes = [2, 64], strides = [1, 1]} : vector<2x192xf32> to vector<2x64xf32>
    %81 = vector.broadcast %9 : vector<1x64xf32> to vector<2x64xf32>
    %82 = arith.addf %80, %81 : vector<2x64xf32>
    %83 = arith.mulf %77, %82 : vector<2x64xf32>
    %84 = arith.addf %79, %83 : vector<2x64xf32>
    %85 = math.tanh %84 : vector<2x64xf32>
    %cst_45 = arith.constant 1.000000e+00 : f32
    %86 = vector.broadcast %cst_45 : f32 to vector<2x64xf32>
    %87 = arith.subf %86, %78 : vector<2x64xf32>
    %88 = arith.mulf %87, %85 : vector<2x64xf32>
    %89 = arith.mulf %78, %63 : vector<2x64xf32>
    %90 = arith.addf %88, %89 : vector<2x64xf32>
    %91 = vector.extract_strided_slice %35 {offsets = [4, 0], sizes = [2, 192], strides = [1, 1]} : vector<16x192xf32> to vector<2x192xf32>
    %92 = arith.truncf %90 : vector<2x64xf32> to vector<2x64xbf16>
    %cst_46 = arith.constant dense<0.000000e+00> : vector<2x192xf32>
    %93 = tpu.matmul %92, %8, %cst_46 {dimension_numbers = #tpu.dot_dimension_numbers<[1], [0], [0], [1], [0, 0, 1, 1], [], []>} : vector<2x64xbf16>, vector<64x192xbf16>, vector<2x192xf32> -> vector<2x192xf32>
    %94 = vector.extract_strided_slice %91 {offsets = [0, 0], sizes = [2, 128], strides = [1, 1]} : vector<2x192xf32> to vector<2x128xf32>
    %95 = vector.extract_strided_slice %93 {offsets = [0, 0], sizes = [2, 128], strides = [1, 1]} : vector<2x192xf32> to vector<2x128xf32>
    %96 = arith.addf %94, %95 : vector<2x128xf32>
    %cst_47 = arith.constant 5.000000e-01 : f32
    %97 = vector.broadcast %cst_47 : f32 to vector<2x128xf32>
    %98 = arith.mulf %97, %96 : vector<2x128xf32>
    %99 = math.tanh %98 : vector<2x128xf32>
    %cst_48 = arith.constant 5.000000e-01 : f32
    %100 = vector.broadcast %cst_48 : f32 to vector<2x128xf32>
    %101 = arith.mulf %100, %99 : vector<2x128xf32>
    %cst_49 = arith.constant 5.000000e-01 : f32
    %102 = vector.broadcast %cst_49 : f32 to vector<2x128xf32>
    %103 = arith.addf %102, %101 : vector<2x128xf32>
    %104 = vector.extract_strided_slice %103 {offsets = [0, 0], sizes = [2, 64], strides = [1, 1]} : vector<2x128xf32> to vector<2x64xf32>
    %105 = vector.extract_strided_slice %103 {offsets = [0, 64], sizes = [2, 64], strides = [1, 1]} : vector<2x128xf32> to vector<2x64xf32>
    %106 = vector.extract_strided_slice %91 {offsets = [0, 128], sizes = [2, 64], strides = [1, 1]} : vector<2x192xf32> to vector<2x64xf32>
    %107 = vector.extract_strided_slice %93 {offsets = [0, 128], sizes = [2, 64], strides = [1, 1]} : vector<2x192xf32> to vector<2x64xf32>
    %108 = vector.broadcast %9 : vector<1x64xf32> to vector<2x64xf32>
    %109 = arith.addf %107, %108 : vector<2x64xf32>
    %110 = arith.mulf %104, %109 : vector<2x64xf32>
    %111 = arith.addf %106, %110 : vector<2x64xf32>
    %112 = math.tanh %111 : vector<2x64xf32>
    %cst_50 = arith.constant 1.000000e+00 : f32
    %113 = vector.broadcast %cst_50 : f32 to vector<2x64xf32>
    %114 = arith.subf %113, %105 : vector<2x64xf32>
    %115 = arith.mulf %114, %112 : vector<2x64xf32>
    %116 = arith.mulf %105, %90 : vector<2x64xf32>
    %117 = arith.addf %115, %116 : vector<2x64xf32>
    %118 = vector.extract_strided_slice %35 {offsets = [6, 0], sizes = [2, 192], strides = [1, 1]} : vector<16x192xf32> to vector<2x192xf32>
    %119 = arith.truncf %117 : vector<2x64xf32> to vector<2x64xbf16>
    %cst_51 = arith.constant dense<0.000000e+00> : vector<2x192xf32>
    %120 = tpu.matmul %119, %8, %cst_51 {dimension_numbers = #tpu.dot_dimension_numbers<[1], [0], [0], [1], [0, 0, 1, 1], [], []>} : vector<2x64xbf16>, vector<64x192xbf16>, vector<2x192xf32> -> vector<2x192xf32>
    %121 = vector.extract_strided_slice %118 {offsets = [0, 0], sizes = [2, 128], strides = [1, 1]} : vector<2x192xf32> to vector<2x128xf32>
    %122 = vector.extract_strided_slice %120 {offsets = [0, 0], sizes = [2, 128], strides = [1, 1]} : vector<2x192xf32> to vector<2x128xf32>
    %123 = arith.addf %121, %122 : vector<2x128xf32>
    %cst_52 = arith.constant 5.000000e-01 : f32
    %124 = vector.broadcast %cst_52 : f32 to vector<2x128xf32>
    %125 = arith.mulf %124, %123 : vector<2x128xf32>
    %126 = math.tanh %125 : vector<2x128xf32>
    %cst_53 = arith.constant 5.000000e-01 : f32
    %127 = vector.broadcast %cst_53 : f32 to vector<2x128xf32>
    %128 = arith.mulf %127, %126 : vector<2x128xf32>
    %cst_54 = arith.constant 5.000000e-01 : f32
    %129 = vector.broadcast %cst_54 : f32 to vector<2x128xf32>
    %130 = arith.addf %129, %128 : vector<2x128xf32>
    %131 = vector.extract_strided_slice %130 {offsets = [0, 0], sizes = [2, 64], strides = [1, 1]} : vector<2x128xf32> to vector<2x64xf32>
    %132 = vector.extract_strided_slice %130 {offsets = [0, 64], sizes = [2, 64], strides = [1, 1]} : vector<2x128xf32> to vector<2x64xf32>
    %133 = vector.extract_strided_slice %118 {offsets = [0, 128], sizes = [2, 64], strides = [1, 1]} : vector<2x192xf32> to vector<2x64xf32>
    %134 = vector.extract_strided_slice %120 {offsets = [0, 128], sizes = [2, 64], strides = [1, 1]} : vector<2x192xf32> to vector<2x64xf32>
    %135 = vector.broadcast %9 : vector<1x64xf32> to vector<2x64xf32>
    %136 = arith.addf %134, %135 : vector<2x64xf32>
    %137 = arith.mulf %131, %136 : vector<2x64xf32>
    %138 = arith.addf %133, %137 : vector<2x64xf32>
    %139 = math.tanh %138 : vector<2x64xf32>
    %cst_55 = arith.constant 1.000000e+00 : f32
    %140 = vector.broadcast %cst_55 : f32 to vector<2x64xf32>
    %141 = arith.subf %140, %132 : vector<2x64xf32>
    %142 = arith.mulf %141, %139 : vector<2x64xf32>
    %143 = arith.mulf %132, %117 : vector<2x64xf32>
    %144 = arith.addf %142, %143 : vector<2x64xf32>
    %145 = vector.extract_strided_slice %35 {offsets = [8, 0], sizes = [2, 192], strides = [1, 1]} : vector<16x192xf32> to vector<2x192xf32>
    %146 = arith.truncf %144 : vector<2x64xf32> to vector<2x64xbf16>
    %cst_56 = arith.constant dense<0.000000e+00> : vector<2x192xf32>
    %147 = tpu.matmul %146, %8, %cst_56 {dimension_numbers = #tpu.dot_dimension_numbers<[1], [0], [0], [1], [0, 0, 1, 1], [], []>} : vector<2x64xbf16>, vector<64x192xbf16>, vector<2x192xf32> -> vector<2x192xf32>
    %148 = vector.extract_strided_slice %145 {offsets = [0, 0], sizes = [2, 128], strides = [1, 1]} : vector<2x192xf32> to vector<2x128xf32>
    %149 = vector.extract_strided_slice %147 {offsets = [0, 0], sizes = [2, 128], strides = [1, 1]} : vector<2x192xf32> to vector<2x128xf32>
    %150 = arith.addf %148, %149 : vector<2x128xf32>
    %cst_57 = arith.constant 5.000000e-01 : f32
    %151 = vector.broadcast %cst_57 : f32 to vector<2x128xf32>
    %152 = arith.mulf %151, %150 : vector<2x128xf32>
    %153 = math.tanh %152 : vector<2x128xf32>
    %cst_58 = arith.constant 5.000000e-01 : f32
    %154 = vector.broadcast %cst_58 : f32 to vector<2x128xf32>
    %155 = arith.mulf %154, %153 : vector<2x128xf32>
    %cst_59 = arith.constant 5.000000e-01 : f32
    %156 = vector.broadcast %cst_59 : f32 to vector<2x128xf32>
    %157 = arith.addf %156, %155 : vector<2x128xf32>
    %158 = vector.extract_strided_slice %157 {offsets = [0, 0], sizes = [2, 64], strides = [1, 1]} : vector<2x128xf32> to vector<2x64xf32>
    %159 = vector.extract_strided_slice %157 {offsets = [0, 64], sizes = [2, 64], strides = [1, 1]} : vector<2x128xf32> to vector<2x64xf32>
    %160 = vector.extract_strided_slice %145 {offsets = [0, 128], sizes = [2, 64], strides = [1, 1]} : vector<2x192xf32> to vector<2x64xf32>
    %161 = vector.extract_strided_slice %147 {offsets = [0, 128], sizes = [2, 64], strides = [1, 1]} : vector<2x192xf32> to vector<2x64xf32>
    %162 = vector.broadcast %9 : vector<1x64xf32> to vector<2x64xf32>
    %163 = arith.addf %161, %162 : vector<2x64xf32>
    %164 = arith.mulf %158, %163 : vector<2x64xf32>
    %165 = arith.addf %160, %164 : vector<2x64xf32>
    %166 = math.tanh %165 : vector<2x64xf32>
    %cst_60 = arith.constant 1.000000e+00 : f32
    %167 = vector.broadcast %cst_60 : f32 to vector<2x64xf32>
    %168 = arith.subf %167, %159 : vector<2x64xf32>
    %169 = arith.mulf %168, %166 : vector<2x64xf32>
    %170 = arith.mulf %159, %144 : vector<2x64xf32>
    %171 = arith.addf %169, %170 : vector<2x64xf32>
    %172 = vector.extract_strided_slice %35 {offsets = [10, 0], sizes = [2, 192], strides = [1, 1]} : vector<16x192xf32> to vector<2x192xf32>
    %173 = arith.truncf %171 : vector<2x64xf32> to vector<2x64xbf16>
    %cst_61 = arith.constant dense<0.000000e+00> : vector<2x192xf32>
    %174 = tpu.matmul %173, %8, %cst_61 {dimension_numbers = #tpu.dot_dimension_numbers<[1], [0], [0], [1], [0, 0, 1, 1], [], []>} : vector<2x64xbf16>, vector<64x192xbf16>, vector<2x192xf32> -> vector<2x192xf32>
    %175 = vector.extract_strided_slice %172 {offsets = [0, 0], sizes = [2, 128], strides = [1, 1]} : vector<2x192xf32> to vector<2x128xf32>
    %176 = vector.extract_strided_slice %174 {offsets = [0, 0], sizes = [2, 128], strides = [1, 1]} : vector<2x192xf32> to vector<2x128xf32>
    %177 = arith.addf %175, %176 : vector<2x128xf32>
    %cst_62 = arith.constant 5.000000e-01 : f32
    %178 = vector.broadcast %cst_62 : f32 to vector<2x128xf32>
    %179 = arith.mulf %178, %177 : vector<2x128xf32>
    %180 = math.tanh %179 : vector<2x128xf32>
    %cst_63 = arith.constant 5.000000e-01 : f32
    %181 = vector.broadcast %cst_63 : f32 to vector<2x128xf32>
    %182 = arith.mulf %181, %180 : vector<2x128xf32>
    %cst_64 = arith.constant 5.000000e-01 : f32
    %183 = vector.broadcast %cst_64 : f32 to vector<2x128xf32>
    %184 = arith.addf %183, %182 : vector<2x128xf32>
    %185 = vector.extract_strided_slice %184 {offsets = [0, 0], sizes = [2, 64], strides = [1, 1]} : vector<2x128xf32> to vector<2x64xf32>
    %186 = vector.extract_strided_slice %184 {offsets = [0, 64], sizes = [2, 64], strides = [1, 1]} : vector<2x128xf32> to vector<2x64xf32>
    %187 = vector.extract_strided_slice %172 {offsets = [0, 128], sizes = [2, 64], strides = [1, 1]} : vector<2x192xf32> to vector<2x64xf32>
    %188 = vector.extract_strided_slice %174 {offsets = [0, 128], sizes = [2, 64], strides = [1, 1]} : vector<2x192xf32> to vector<2x64xf32>
    %189 = vector.broadcast %9 : vector<1x64xf32> to vector<2x64xf32>
    %190 = arith.addf %188, %189 : vector<2x64xf32>
    %191 = arith.mulf %185, %190 : vector<2x64xf32>
    %192 = arith.addf %187, %191 : vector<2x64xf32>
    %193 = math.tanh %192 : vector<2x64xf32>
    %cst_65 = arith.constant 1.000000e+00 : f32
    %194 = vector.broadcast %cst_65 : f32 to vector<2x64xf32>
    %195 = arith.subf %194, %186 : vector<2x64xf32>
    %196 = arith.mulf %195, %193 : vector<2x64xf32>
    %197 = arith.mulf %186, %171 : vector<2x64xf32>
    %198 = arith.addf %196, %197 : vector<2x64xf32>
    %199 = vector.extract_strided_slice %35 {offsets = [12, 0], sizes = [2, 192], strides = [1, 1]} : vector<16x192xf32> to vector<2x192xf32>
    %200 = arith.truncf %198 : vector<2x64xf32> to vector<2x64xbf16>
    %cst_66 = arith.constant dense<0.000000e+00> : vector<2x192xf32>
    %201 = tpu.matmul %200, %8, %cst_66 {dimension_numbers = #tpu.dot_dimension_numbers<[1], [0], [0], [1], [0, 0, 1, 1], [], []>} : vector<2x64xbf16>, vector<64x192xbf16>, vector<2x192xf32> -> vector<2x192xf32>
    %202 = vector.extract_strided_slice %199 {offsets = [0, 0], sizes = [2, 128], strides = [1, 1]} : vector<2x192xf32> to vector<2x128xf32>
    %203 = vector.extract_strided_slice %201 {offsets = [0, 0], sizes = [2, 128], strides = [1, 1]} : vector<2x192xf32> to vector<2x128xf32>
    %204 = arith.addf %202, %203 : vector<2x128xf32>
    %cst_67 = arith.constant 5.000000e-01 : f32
    %205 = vector.broadcast %cst_67 : f32 to vector<2x128xf32>
    %206 = arith.mulf %205, %204 : vector<2x128xf32>
    %207 = math.tanh %206 : vector<2x128xf32>
    %cst_68 = arith.constant 5.000000e-01 : f32
    %208 = vector.broadcast %cst_68 : f32 to vector<2x128xf32>
    %209 = arith.mulf %208, %207 : vector<2x128xf32>
    %cst_69 = arith.constant 5.000000e-01 : f32
    %210 = vector.broadcast %cst_69 : f32 to vector<2x128xf32>
    %211 = arith.addf %210, %209 : vector<2x128xf32>
    %212 = vector.extract_strided_slice %211 {offsets = [0, 0], sizes = [2, 64], strides = [1, 1]} : vector<2x128xf32> to vector<2x64xf32>
    %213 = vector.extract_strided_slice %211 {offsets = [0, 64], sizes = [2, 64], strides = [1, 1]} : vector<2x128xf32> to vector<2x64xf32>
    %214 = vector.extract_strided_slice %199 {offsets = [0, 128], sizes = [2, 64], strides = [1, 1]} : vector<2x192xf32> to vector<2x64xf32>
    %215 = vector.extract_strided_slice %201 {offsets = [0, 128], sizes = [2, 64], strides = [1, 1]} : vector<2x192xf32> to vector<2x64xf32>
    %216 = vector.broadcast %9 : vector<1x64xf32> to vector<2x64xf32>
    %217 = arith.addf %215, %216 : vector<2x64xf32>
    %218 = arith.mulf %212, %217 : vector<2x64xf32>
    %219 = arith.addf %214, %218 : vector<2x64xf32>
    %220 = math.tanh %219 : vector<2x64xf32>
    %cst_70 = arith.constant 1.000000e+00 : f32
    %221 = vector.broadcast %cst_70 : f32 to vector<2x64xf32>
    %222 = arith.subf %221, %213 : vector<2x64xf32>
    %223 = arith.mulf %222, %220 : vector<2x64xf32>
    %224 = arith.mulf %213, %198 : vector<2x64xf32>
    %225 = arith.addf %223, %224 : vector<2x64xf32>
    %226 = vector.extract_strided_slice %35 {offsets = [14, 0], sizes = [2, 192], strides = [1, 1]} : vector<16x192xf32> to vector<2x192xf32>
    %227 = arith.truncf %225 : vector<2x64xf32> to vector<2x64xbf16>
    %cst_71 = arith.constant dense<0.000000e+00> : vector<2x192xf32>
    %228 = tpu.matmul %227, %8, %cst_71 {dimension_numbers = #tpu.dot_dimension_numbers<[1], [0], [0], [1], [0, 0, 1, 1], [], []>} : vector<2x64xbf16>, vector<64x192xbf16>, vector<2x192xf32> -> vector<2x192xf32>
    %229 = vector.extract_strided_slice %226 {offsets = [0, 0], sizes = [2, 128], strides = [1, 1]} : vector<2x192xf32> to vector<2x128xf32>
    %230 = vector.extract_strided_slice %228 {offsets = [0, 0], sizes = [2, 128], strides = [1, 1]} : vector<2x192xf32> to vector<2x128xf32>
    %231 = arith.addf %229, %230 : vector<2x128xf32>
    %cst_72 = arith.constant 5.000000e-01 : f32
    %232 = vector.broadcast %cst_72 : f32 to vector<2x128xf32>
    %233 = arith.mulf %232, %231 : vector<2x128xf32>
    %234 = math.tanh %233 : vector<2x128xf32>
    %cst_73 = arith.constant 5.000000e-01 : f32
    %235 = vector.broadcast %cst_73 : f32 to vector<2x128xf32>
    %236 = arith.mulf %235, %234 : vector<2x128xf32>
    %cst_74 = arith.constant 5.000000e-01 : f32
    %237 = vector.broadcast %cst_74 : f32 to vector<2x128xf32>
    %238 = arith.addf %237, %236 : vector<2x128xf32>
    %239 = vector.extract_strided_slice %238 {offsets = [0, 0], sizes = [2, 64], strides = [1, 1]} : vector<2x128xf32> to vector<2x64xf32>
    %240 = vector.extract_strided_slice %238 {offsets = [0, 64], sizes = [2, 64], strides = [1, 1]} : vector<2x128xf32> to vector<2x64xf32>
    %241 = vector.extract_strided_slice %226 {offsets = [0, 128], sizes = [2, 64], strides = [1, 1]} : vector<2x192xf32> to vector<2x64xf32>
    %242 = vector.extract_strided_slice %228 {offsets = [0, 128], sizes = [2, 64], strides = [1, 1]} : vector<2x192xf32> to vector<2x64xf32>
    %243 = vector.broadcast %9 : vector<1x64xf32> to vector<2x64xf32>
    %244 = arith.addf %242, %243 : vector<2x64xf32>
    %245 = arith.mulf %239, %244 : vector<2x64xf32>
    %246 = arith.addf %241, %245 : vector<2x64xf32>
    %247 = math.tanh %246 : vector<2x64xf32>
    %cst_75 = arith.constant 1.000000e+00 : f32
    %248 = vector.broadcast %cst_75 : f32 to vector<2x64xf32>
    %249 = arith.subf %248, %240 : vector<2x64xf32>
    %250 = arith.mulf %249, %247 : vector<2x64xf32>
    %251 = arith.mulf %240, %225 : vector<2x64xf32>
    %252 = arith.addf %250, %251 : vector<2x64xf32>
    %253 = tpu.concatenate %63, %90, %117, %144, %171, %198, %225, %252 in 0 : vector<2x64xf32>, vector<2x64xf32>, vector<2x64xf32>, vector<2x64xf32>, vector<2x64xf32>, vector<2x64xf32>, vector<2x64xf32>, vector<2x64xf32> -> vector<16x64xf32>
    %254 = arith.truncf %253 : vector<16x64xf32> to vector<16x64xbf16>
    %cst_76 = arith.constant dense<0.000000e+00> : vector<16x128xf32>
    %255 = tpu.matmul %254, %10, %cst_76 {dimension_numbers = #tpu.dot_dimension_numbers<[1], [0], [0], [1], [0, 0, 1, 1], [], []>} : vector<16x64xbf16>, vector<64x128xbf16>, vector<16x128xf32> -> vector<16x128xf32>
    %256 = vector.broadcast %11 : vector<1x128xf32> to vector<16x128xf32>
    %257 = arith.addf %255, %256 : vector<16x128xf32>
    %cst_77 = arith.constant 0.000000e+00 : f32
    %258 = vector.broadcast %cst_77 : f32 to vector<16x128xf32>
    %259 = arith.maximumf %257, %258 : vector<16x128xf32>
    %260 = arith.truncf %259 : vector<16x128xf32> to vector<16x128xbf16>
    %cst_78 = arith.constant dense<0.000000e+00> : vector<16x128xf32>
    %261 = tpu.matmul %260, %12, %cst_78 {dimension_numbers = #tpu.dot_dimension_numbers<[1], [0], [0], [1], [0, 0, 1, 1], [], []>} : vector<16x128xbf16>, vector<128x128xbf16>, vector<16x128xf32> -> vector<16x128xf32>
    %262 = vector.broadcast %13 : vector<1x128xf32> to vector<16x128xf32>
    %263 = arith.addf %261, %262 : vector<16x128xf32>
    %264 = vector.extract_strided_slice %263 {offsets = [0, 0], sizes = [2, 128], strides = [1, 1]} : vector<16x128xf32> to vector<2x128xf32>
    %265 = vector.extract_strided_slice %263 {offsets = [2, 0], sizes = [2, 128], strides = [1, 1]} : vector<16x128xf32> to vector<2x128xf32>
    %266 = vector.extract_strided_slice %263 {offsets = [4, 0], sizes = [2, 128], strides = [1, 1]} : vector<16x128xf32> to vector<2x128xf32>
    %267 = vector.extract_strided_slice %263 {offsets = [6, 0], sizes = [2, 128], strides = [1, 1]} : vector<16x128xf32> to vector<2x128xf32>
    %268 = vector.extract_strided_slice %263 {offsets = [8, 0], sizes = [2, 128], strides = [1, 1]} : vector<16x128xf32> to vector<2x128xf32>
    %269 = vector.extract_strided_slice %263 {offsets = [10, 0], sizes = [2, 128], strides = [1, 1]} : vector<16x128xf32> to vector<2x128xf32>
    %270 = vector.extract_strided_slice %263 {offsets = [12, 0], sizes = [2, 128], strides = [1, 1]} : vector<16x128xf32> to vector<2x128xf32>
    %271 = vector.extract_strided_slice %263 {offsets = [14, 0], sizes = [2, 128], strides = [1, 1]} : vector<16x128xf32> to vector<2x128xf32>
    %272 = tpu.concatenate %264, %265, %266, %267, %268, %269, %270, %271 in 1 : vector<2x128xf32>, vector<2x128xf32>, vector<2x128xf32>, vector<2x128xf32>, vector<2x128xf32>, vector<2x128xf32>, vector<2x128xf32>, vector<2x128xf32> -> vector<2x1024xf32>
    %c0_79 = arith.constant 0 : index
    %c0_80 = arith.constant 0 : index
    %273 = vector.load %arg16[%c0_79, %c0_80] : memref<2x1024xf32, #tpu.memory_space<vmem>>, vector<2x1024xf32>
    tpu.vector_store %arg16[%c0_79, %c0_80], %272 {strides = array<i32>} : memref<2x1024xf32, #tpu.memory_space<vmem>>, vector<2x1024xf32>,
    return
  }
  func.func @transform_0(%arg0: i32) -> (i32, i32, i32) {
    %c0_i32 = arith.constant 0 : i32
    %c0_i32_0 = arith.constant 0 : i32
    %c0_i32_1 = arith.constant 0 : i32
    return %c0_i32, %arg0, %c0_i32_0 : i32, i32, i32
  }
  func.func @transform_1(%arg0: i32) -> (i32, i32) {
    %c0_i32 = arith.constant 0 : i32
    %c0_i32_0 = arith.constant 0 : i32
    %c0_i32_1 = arith.constant 0 : i32
    return %c0_i32, %c0_i32_0 : i32, i32
  }
  func.func @transform_2(%arg0: i32) -> (i32, i32) {
    %c0_i32 = arith.constant 0 : i32
    %c0_i32_0 = arith.constant 0 : i32
    %c0_i32_1 = arith.constant 0 : i32
    return %c0_i32, %c0_i32_0 : i32, i32
  }
  func.func @transform_3(%arg0: i32) -> (i32, i32) {
    %c0_i32 = arith.constant 0 : i32
    %c0_i32_0 = arith.constant 0 : i32
    %c0_i32_1 = arith.constant 0 : i32
    return %c0_i32, %c0_i32_0 : i32, i32
  }
  func.func @transform_4(%arg0: i32) -> (i32, i32) {
    %c0_i32 = arith.constant 0 : i32
    %c0_i32_0 = arith.constant 0 : i32
    %c0_i32_1 = arith.constant 0 : i32
    return %c0_i32, %c0_i32_0 : i32, i32
  }
  func.func @transform_5(%arg0: i32) -> (i32, i32) {
    %c0_i32 = arith.constant 0 : i32
    %c0_i32_0 = arith.constant 0 : i32
    %c0_i32_1 = arith.constant 0 : i32
    return %c0_i32, %c0_i32_0 : i32, i32
  }
  func.func @transform_6(%arg0: i32) -> (i32, i32) {
    %c0_i32 = arith.constant 0 : i32
    %c0_i32_0 = arith.constant 0 : i32
    %c0_i32_1 = arith.constant 0 : i32
    return %c0_i32, %c0_i32_0 : i32, i32
  }
  func.func @transform_7(%arg0: i32) -> (i32, i32) {
    %c0_i32 = arith.constant 0 : i32
    %c0_i32_0 = arith.constant 0 : i32
    %c0_i32_1 = arith.constant 0 : i32
    return %c0_i32, %c0_i32_0 : i32, i32
  }
  func.func @transform_8(%arg0: i32) -> (i32, i32) {
    %c0_i32 = arith.constant 0 : i32
    %c0_i32_0 = arith.constant 0 : i32
    %c0_i32_1 = arith.constant 0 : i32
    return %c0_i32, %c0_i32_0 : i32, i32
  }
  func.func @transform_9(%arg0: i32) -> (i32, i32) {
    %c0_i32 = arith.constant 0 : i32
    %c0_i32_0 = arith.constant 0 : i32
    %c0_i32_1 = arith.constant 0 : i32
    return %c0_i32, %c0_i32_0 : i32, i32
  }
  func.func @transform_10(%arg0: i32) -> (i32, i32) {
    %c0_i32 = arith.constant 0 : i32
    %c0_i32_0 = arith.constant 0 : i32
    %c0_i32_1 = arith.constant 0 : i32
    return %c0_i32, %c0_i32_0 : i32, i32
  }
  func.func @transform_11(%arg0: i32) -> (i32, i32) {
    %c0_i32 = arith.constant 0 : i32
    %c0_i32_0 = arith.constant 0 : i32
    %c0_i32_1 = arith.constant 0 : i32
    return %c0_i32, %c0_i32_0 : i32, i32
  }
  func.func @transform_12(%arg0: i32) -> (i32, i32) {
    %c0_i32 = arith.constant 0 : i32
    %c0_i32_0 = arith.constant 0 : i32
    %c0_i32_1 = arith.constant 0 : i32
    return %c0_i32, %c0_i32_0 : i32, i32
  }
  func.func @transform_13(%arg0: i32) -> (i32, i32) {
    %c0_i32 = arith.constant 0 : i32
    %c0_i32_0 = arith.constant 0 : i32
    %c0_i32_1 = arith.constant 0 : i32
    return %c0_i32, %c0_i32_0 : i32, i32
  }
  func.func @transform_14(%arg0: i32) -> (i32, i32) {
    %c0_i32 = arith.constant 0 : i32
    %c0_i32_0 = arith.constant 0 : i32
    %c0_i32_1 = arith.constant 0 : i32
    return %c0_i32, %c0_i32_0 : i32, i32
  }
  func.func @transform_15(%arg0: i32) -> (i32, i32) {
    %c0_i32 = arith.constant 0 : i32
    %c0_i32_0 = arith.constant 0 : i32
    return %arg0, %c0_i32 : i32, i32
  }
}

</mosaic_0001>

<llo_original>
// kernel: tpu_custom_call.1
$region0: #{tpu_custom_call.1}
  #allocation0 [shape = 'u32[]', space=smem, size = 0x4, offset = 0x4, fixed_abs, tag = 'smem constant byte address 0x4 - core index']
  #allocation1 [shape = 'u32[144,128]{1,0:T(1,128)}', space=vmem, size = 0x12000, scoped, tag = 'internal scratch']
  %s0 = inlined_call_operand.vmem [shape: f32[8,2,4], index: 0, kind: input, shape index: {}]
  %s1 = inlined_call_operand.hbm [shape: bf16[4,16], index: 1, kind: input, shape index: {}]
  %s2 = inlined_call_operand.vmem [shape: f32[1,16], index: 2, kind: input, shape index: {}]
  %s3 = inlined_call_operand.vmem [shape: bf16[16,32], index: 3, kind: input, shape index: {}]
  %s4 = inlined_call_operand.hbm [shape: f32[1,32], index: 4, kind: input, shape index: {}]
  %s5 = inlined_call_operand.hbm [shape: bf16[32,64], index: 5, kind: input, shape index: {}]
  %s6 = inlined_call_operand.hbm [shape: f32[1,64], index: 6, kind: input, shape index: {}]
  %s7 = inlined_call_operand.hbm [shape: bf16[64,192], index: 7, kind: input, shape index: {}]
  %s8 = inlined_call_operand.hbm [shape: f32[1,192], index: 8, kind: input, shape index: {}]
  %s9 = inlined_call_operand.hbm [shape: bf16[64,192], index: 9, kind: input, shape index: {}]
  %s10 = inlined_call_operand.hbm [shape: f32[1,64], index: 10, kind: input, shape index: {}]
  %s11 = inlined_call_operand.hbm [shape: bf16[64,128], index: 11, kind: input, shape index: {}]
  %s12 = inlined_call_operand.hbm [shape: f32[1,128], index: 12, kind: input, shape index: {}]
  %s13 = inlined_call_operand.vmem [shape: bf16[128,128], index: 13, kind: input, shape index: {}]
  %s14 = inlined_call_operand.vmem [shape: f32[1,128], index: 14, kind: input, shape index: {}]
  %s15 = inlined_call_operand.hbm [shape: f32[2,1024], index: 15, kind: output, shape index: {}]
  %s16 = sld [smem:[#allocation0]]
  $region110: #{tpu_custom_call.1} parent=0
    _
  %s18 = ssub.s32 1, %s16
  %s19 = scalar_select 0, %s18, %s16
  $region1: #{tpu_custom_call.1} parent=0
    #allocation2 [shape = 'u8[1024]{0}', space=vmem, size = 0x400, scoped, tag = 'input window, operand 1, single buffered']
    #allocation3 [shape = 's32[1]{0}', space=sflag, size = 0x4, scoped, tag = 'scoped memory for tpu_custom_call.1']
    #allocation4 [shape = 's32[1]{0}', space=sflag, size = 0x4, scoped, tag = 'scoped memory for tpu_custom_call.1']
    #allocation5 [shape = 'u8[512]{0}', space=vmem, size = 0x400, scoped, tag = 'input window, operand 4, single buffered']
    #allocation6 [shape = 's32[1]{0}', space=sflag, size = 0x4, scoped, tag = 'scoped memory for tpu_custom_call.1']
    #allocation7 [shape = 'u8[8192]{0}', space=vmem, size = 0x2000, scoped, tag = 'input window, operand 5, single buffered']
    #allocation8 [shape = 'u8[512]{0}', space=vmem, size = 0x400, scoped, tag = 'input window, operand 6, single buffered']
    #allocation9 [shape = 's32[1]{0}', space=sflag, size = 0x4, scoped, tag = 'scoped memory for tpu_custom_call.1']
    #allocation10 [shape = 'u8[32768]{0}', space=vmem, size = 0x8000, scoped, tag = 'input window, operand 7, single buffered']
    #allocation11 [shape = 'u8[1024]{0}', space=vmem, size = 0x400, scoped, tag = 'input window, operand 8, single buffered']
    #allocation12 [shape = 's32[1]{0}', space=sflag, size = 0x4, scoped, tag = 'scoped memory for tpu_custom_call.1']
    #allocation13 [shape = 'u8[32768]{0}', space=vmem, size = 0x8000, scoped, tag = 'input window, operand 9, single buffered']
    #allocation14 [shape = 'u8[512]{0}', space=vmem, size = 0x400, scoped, tag = 'input window, operand 10, single buffered']
    #allocation15 [shape = 's32[1]{0}', space=sflag, size = 0x4, scoped, tag = 'scoped memory for tpu_custom_call.1']
    #allocation16 [shape = 'u8[16384]{0}', space=vmem, size = 0x4000, scoped, tag = 'input window, operand 11, single buffered']
    #allocation17 [shape = 'u8[512]{0}', space=vmem, size = 0x400, scoped, tag = 'input window, operand 12, single buffered']
    #allocation18 [shape = 's32[1]{0}', space=sflag, size = 0x4, scoped, tag = 'scoped memory for tpu_custom_call.1']
    #allocation19 [shape = 'u8[8192]{0}', space=vmem, size = 0x2000, scoped, tag = 'output window, operand 0, single buffered']
    %20 = vsyncpa [#allocation3], 0
    %21 = vsyncpa [#allocation6], 0
    %22 = vsyncpa [#allocation9], 0
    %23 = vsyncpa [#allocation12], 0
    %24 = vsyncpa [#allocation15], 0
    %25 = vsyncpa [#allocation18], 0
    %26 = vsyncpa [#allocation4], 0
    // Predicated region
    $region2: #{tpu_custom_call.1} parent=1 // pred_check
      _
    $region3: #{tpu_custom_call.1} parent=1 // pred_check_branch
      %28 = sbr.rel (0) target = $region5
    $region4: #{tpu_custom_call.1} parent=1 // pred_region
      _
    $region5: #{tpu_custom_call.1} parent=1 // pred_fallthru
      _
    // Predicated region
    $region6: #{tpu_custom_call.1} parent=1 // pred_check
      _
    $region7: #{tpu_custom_call.1} parent=1 // pred_check_branch
      %30 = sbr.rel (0) target = $region9
    $region8: #{tpu_custom_call.1} parent=1 // pred_region
      %s32 = ssub.s32 32, 32
      %33 = vsyncadd [#allocation3], %s32
      %s35 = sshll.u32 [#allocation2], 4
      %s36 = int_to_ptr.vmem [resolvable:$true] %s35
      %38 = dma.hbm_to_vmem [thread:$0]  %s1, 32, %s36, [#allocation3]
    $region9: #{tpu_custom_call.1} parent=1 // pred_fallthru
      _
    // Predicated region
    $region10: #{tpu_custom_call.1} parent=1 // pred_check
      _
    $region11: #{tpu_custom_call.1} parent=1 // pred_check_branch
      %40 = sbr.rel (0) target = $region13
    $region12: #{tpu_custom_call.1} parent=1 // pred_region
      _
    $region13: #{tpu_custom_call.1} parent=1 // pred_fallthru
      _
    // Predicated region
    $region14: #{tpu_custom_call.1} parent=1 // pred_check
      _
    $region15: #{tpu_custom_call.1} parent=1 // pred_check_branch
      %42 = sbr.rel (0) target = $region17
    $region16: #{tpu_custom_call.1} parent=1 // pred_region
      _
    $region17: #{tpu_custom_call.1} parent=1 // pred_fallthru
      _
    // Predicated region
    $region18: #{tpu_custom_call.1} parent=1 // pred_check
      _
    $region19: #{tpu_custom_call.1} parent=1 // pred_check_branch
      %44 = sbr.rel (0) target = $region21
    $region20: #{tpu_custom_call.1} parent=1 // pred_region
      %s46 = ssub.s32 16, 16
      %47 = vsyncadd [#allocation6], %s46
      %s49 = sshll.u32 [#allocation5], 4
      %s50 = int_to_ptr.vmem [resolvable:$true] %s49
      %52 = dma.hbm_to_vmem [thread:$0]  %s4, 16, %s50, [#allocation6]
    $region21: #{tpu_custom_call.1} parent=1 // pred_fallthru
      _
    // Predicated region
    $region22: #{tpu_custom_call.1} parent=1 // pred_check
      _
    $region23: #{tpu_custom_call.1} parent=1 // pred_check_branch
      %54 = sbr.rel (0) target = $region25
    $region24: #{tpu_custom_call.1} parent=1 // pred_region
      %s56 = ssub.s32 256, 256
      %57 = vsyncadd [#allocation6], %s56
      %s58 = sshll.u32 [#allocation7], 4
      %s59 = int_to_ptr.vmem [resolvable:$true] %s58
      %64 = dma.hbm_to_vmem [thread:$0]  %s5, 256, %s59, [#allocation6], 64, 64, 4
    $region25: #{tpu_custom_call.1} parent=1 // pred_fallthru
      _
    // Predicated region
    $region26: #{tpu_custom_call.1} parent=1 // pred_check
      _
    $region27: #{tpu_custom_call.1} parent=1 // pred_check_branch
      %66 = sbr.rel (0) target = $region29
    $region28: #{tpu_custom_call.1} parent=1 // pred_region
      %s68 = ssub.s32 16, 16
      %69 = vsyncadd [#allocation9], %s68
      %s71 = sshll.u32 [#allocation8], 4
      %s72 = int_to_ptr.vmem [resolvable:$true] %s71
      %74 = dma.hbm_to_vmem [thread:$0]  %s6, 16, %s72, [#allocation9]
    $region29: #{tpu_custom_call.1} parent=1 // pred_fallthru
      _
    // Predicated region
    $region30: #{tpu_custom_call.1} parent=1 // pred_check
      _
    $region31: #{tpu_custom_call.1} parent=1 // pred_check_branch
      %76 = sbr.rel (0) target = $region33
    $region32: #{tpu_custom_call.1} parent=1 // pred_region
      %s78 = ssub.s32 1024, 1024
      %79 = vsyncadd [#allocation9], %s78
      %s80 = sshll.u32 [#allocation10], 4
      %s81 = int_to_ptr.vmem [resolvable:$true] %s80
      %86 = dma.hbm_to_vmem [thread:$0]  %s7, 1024, %s81, [#allocation9], 128, 128, 8
    $region33: #{tpu_custom_call.1} parent=1 // pred_fallthru
      _
    // Predicated region
    $region34: #{tpu_custom_call.1} parent=1 // pred_check
      _
    $region35: #{tpu_custom_call.1} parent=1 // pred_check_branch
      %88 = sbr.rel (0) target = $region37
    $region36: #{tpu_custom_call.1} parent=1 // pred_region
      %s90 = ssub.s32 32, 32
      %91 = vsyncadd [#allocation12], %s90
      %s93 = sshll.u32 [#allocation11], 4
      %s94 = int_to_ptr.vmem [resolvable:$true] %s93
      %96 = dma.hbm_to_vmem [thread:$0]  %s8, 32, %s94, [#allocation12]
    $region37: #{tpu_custom_call.1} parent=1 // pred_fallthru
      _
    // Predicated region
    $region38: #{tpu_custom_call.1} parent=1 // pred_check
      _
    $region39: #{tpu_custom_call.1} parent=1 // pred_check_branch
      %98 = sbr.rel (0) target = $region41
    $region40: #{tpu_custom_call.1} parent=1 // pred_region
      %s100 = ssub.s32 1024, 1024
      %101 = vsyncadd [#allocation12], %s100
      %s102 = sshll.u32 [#allocation13], 4
      %s103 = int_to_ptr.vmem [resolvable:$true] %s102
      %108 = dma.hbm_to_vmem [thread:$0]  %s9, 1024, %s103, [#allocation12], 128, 128, 8
    $region41: #{tpu_custom_call.1} parent=1 // pred_fallthru
      _
    // Predicated region
    $region42: #{tpu_custom_call.1} parent=1 // pred_check
      _
    $region43: #{tpu_custom_call.1} parent=1 // pred_check_branch
      %110 = sbr.rel (0) target = $region45
    $region44: #{tpu_custom_call.1} parent=1 // pred_region
      %s112 = ssub.s32 16, 16
      %113 = vsyncadd [#allocation15], %s112
      %s115 = sshll.u32 [#allocation14], 4
      %s116 = int_to_ptr.vmem [resolvable:$true] %s115
      %118 = dma.hbm_to_vmem [thread:$0]  %s10, 16, %s116, [#allocation15]
    $region45: #{tpu_custom_call.1} parent=1 // pred_fallthru
      _
    // Predicated region
    $region46: #{tpu_custom_call.1} parent=1 // pred_check
      _
    $region47: #{tpu_custom_call.1} parent=1 // pred_check_branch
      %120 = sbr.rel (0) target = $region49
    $region48: #{tpu_custom_call.1} parent=1 // pred_region
      %s122 = ssub.s32 512, 512
      %123 = vsyncadd [#allocation15], %s122
      %s124 = sshll.u32 [#allocation16], 4
      %s125 = int_to_ptr.vmem [resolvable:$true] %s124
      %130 = dma.hbm_to_vmem [thread:$0]  %s11, 512, %s125, [#allocation15], 64, 64, 4
    $region49: #{tpu_custom_call.1} parent=1 // pred_fallthru
      _
    // Predicated region
    $region50: #{tpu_custom_call.1} parent=1 // pred_check
      _
    $region51: #{tpu_custom_call.1} parent=1 // pred_check_branch
      %132 = sbr.rel (0) target = $region53
    $region52: #{tpu_custom_call.1} parent=1 // pred_region
      %s134 = ssub.s32 16, 16
      %135 = vsyncadd [#allocation18], %s134
      %s137 = sshll.u32 [#allocation17], 4
      %s138 = int_to_ptr.vmem [resolvable:$true] %s137
      %140 = dma.hbm_to_vmem [thread:$0]  %s12, 16, %s138, [#allocation18]
    $region53: #{tpu_custom_call.1} parent=1 // pred_fallthru
      _
    // Predicated region
    $region54: #{tpu_custom_call.1} parent=1 // pred_check
      _
    $region55: #{tpu_custom_call.1} parent=1 // pred_check_branch
      %142 = sbr.rel (0) target = $region57
    $region56: #{tpu_custom_call.1} parent=1 // pred_region
      _
    $region57: #{tpu_custom_call.1} parent=1 // pred_fallthru
      _
    // Predicated region
    $region58: #{tpu_custom_call.1} parent=1 // pred_check
      _
    $region59: #{tpu_custom_call.1} parent=1 // pred_check_branch
      %144 = sbr.rel (0) target = $region61
    $region60: #{tpu_custom_call.1} parent=1 // pred_region
      _
    $region61: #{tpu_custom_call.1} parent=1 // pred_fallthru
      _
    // Predicated region
    $region62: #{tpu_custom_call.1} parent=1 // pred_check
      _
    $region63: #{tpu_custom_call.1} parent=1 // pred_check_branch
      %146 = sbr.rel (0) target = $region65
    $region64: #{tpu_custom_call.1} parent=1 // pred_region
      %147 = dma.done [#allocation3], 32
    $region65: #{tpu_custom_call.1} parent=1 // pred_fallthru
      _
    // Predicated region
    $region66: #{tpu_custom_call.1} parent=1 // pred_check
      _
    $region67: #{tpu_custom_call.1} parent=1 // pred_check_branch
      %149 = sbr.rel (0) target = $region69
    $region68: #{tpu_custom_call.1} parent=1 // pred_region
      %150 = dma.done [#allocation6], 16
    $region69: #{tpu_custom_call.1} parent=1 // pred_fallthru
      _
    // Predicated region
    $region70: #{tpu_custom_call.1} parent=1 // pred_check
      _
    $region71: #{tpu_custom_call.1} parent=1 // pred_check_branch
      %152 = sbr.rel (0) target = $region73
    $region72: #{tpu_custom_call.1} parent=1 // pred_region
      %153 = dma.done [#allocation6], 256
    $region73: #{tpu_custom_call.1} parent=1 // pred_fallthru
      _
    // Predicated region
    $region74: #{tpu_custom_call.1} parent=1 // pred_check
      _
    $region75: #{tpu_custom_call.1} parent=1 // pred_check_branch
      %155 = sbr.rel (0) target = $region77
    $region76: #{tpu_custom_call.1} parent=1 // pred_region
      %156 = dma.done [#allocation9], 16
    $region77: #{tpu_custom_call.1} parent=1 // pred_fallthru
      _
    // Predicated region
    $region78: #{tpu_custom_call.1} parent=1 // pred_check
      _
    $region79: #{tpu_custom_call.1} parent=1 // pred_check_branch
      %158 = sbr.rel (0) target = $region81
    $region80: #{tpu_custom_call.1} parent=1 // pred_region
      %159 = dma.done [#allocation9], 1024
    $region81: #{tpu_custom_call.1} parent=1 // pred_fallthru
      _
    // Predicated region
    $region82: #{tpu_custom_call.1} parent=1 // pred_check
      _
    $region83: #{tpu_custom_call.1} parent=1 // pred_check_branch
      %161 = sbr.rel (0) target = $region85
    $region84: #{tpu_custom_call.1} parent=1 // pred_region
      %162 = dma.done [#allocation12], 32
    $region85: #{tpu_custom_call.1} parent=1 // pred_fallthru
      _
    // Predicated region
    $region86: #{tpu_custom_call.1} parent=1 // pred_check
      _
    $region87: #{tpu_custom_call.1} parent=1 // pred_check_branch
      %164 = sbr.rel (0) target = $region89
    $region88: #{tpu_custom_call.1} parent=1 // pred_region
      %165 = dma.done [#allocation12], 1024
    $region89: #{tpu_custom_call.1} parent=1 // pred_fallthru
      _
    // Predicated region
    $region90: #{tpu_custom_call.1} parent=1 // pred_check
      _
    $region91: #{tpu_custom_call.1} parent=1 // pred_check_branch
      %167 = sbr.rel (0) target = $region93
    $region92: #{tpu_custom_call.1} parent=1 // pred_region
      %168 = dma.done [#allocation15], 16
    $region93: #{tpu_custom_call.1} parent=1 // pred_fallthru
      _
    // Predicated region
    $region94: #{tpu_custom_call.1} parent=1 // pred_check
      _
    $region95: #{tpu_custom_call.1} parent=1 // pred_check_branch
      %170 = sbr.rel (0) target = $region97
    $region96: #{tpu_custom_call.1} parent=1 // pred_region
      %171 = dma.done [#allocation15], 512
    $region97: #{tpu_custom_call.1} parent=1 // pred_fallthru
      _
    // Predicated region
    $region98: #{tpu_custom_call.1} parent=1 // pred_check
      _
    $region99: #{tpu_custom_call.1} parent=1 // pred_check_branch
      %173 = sbr.rel (0) target = $region101
    $region100: #{tpu_custom_call.1} parent=1 // pred_region
      %174 = dma.done [#allocation18], 16
    $region101: #{tpu_custom_call.1} parent=1 // pred_fallthru
      _
    %v176 = vld [vmem:[#allocation2] sm:$0x3]
    %v177 = vld [vmem:[%s2] sm:$0x1]
    %v178 = vld [vmem:[%s3] sm:$0xf]
    %v179 = vld [vmem:[%s3 + $0x4] sm:$0xf]
    %v180 = vld [vmem:[#allocation5] sm:$0x1]
    %v181 = vld [vmem:[#allocation7] sm:$0xf]
    %v182 = vld [vmem:[#allocation7 + $0x4] sm:$0xf]
    %v183 = vld [vmem:[#allocation7 + $0x8] sm:$0xf]
    %v184 = vld [vmem:[#allocation7 + $0xc] sm:$0xf]
    %v185 = vld [vmem:[#allocation8] sm:$0x1]
    %v186 = vld [vmem:[#allocation10] sm:$0xff]
    %v187 = vld [vmem:[#allocation10 + $0x8] sm:$0xff]
    %v188 = vld [vmem:[#allocation10 + $0x10] sm:$0xff]
    %v189 = vld [vmem:[#allocation10 + $0x18] sm:$0xff]
    %v190 = vld [vmem:[#allocation10 + $0x20] sm:$0xff]
    %v191 = vld [vmem:[#allocation10 + $0x28] sm:$0xff]
    %v192 = vld [vmem:[#allocation10 + $0x30] sm:$0xff]
    %v193 = vld [vmem:[#allocation10 + $0x38] sm:$0xff]
    %v194 = vld [vmem:[#allocation11] sm:$0x3]
    %v195 = vld [vmem:[#allocation13] sm:$0xff]
    %v196 = vld [vmem:[#allocation13 + $0x8] sm:$0xff]
    %v197 = vld [vmem:[#allocation13 + $0x10] sm:$0xff]
    %v198 = vld [vmem:[#allocation13 + $0x18] sm:$0xff]
    %v199 = vld [vmem:[#allocation13 + $0x20] sm:$0xff]
    %v200 = vld [vmem:[#allocation13 + $0x28] sm:$0xff]
    %v201 = vld [vmem:[#allocation13 + $0x30] sm:$0xff]
    %v202 = vld [vmem:[#allocation13 + $0x38] sm:$0xff]
    %v203 = vld [vmem:[#allocation14] sm:$0x1]
    %v204 = vld [vmem:[#allocation16] sm:$0xf]
    %v205 = vld [vmem:[#allocation16 + $0x4] sm:$0xf]
    %v206 = vld [vmem:[#allocation16 + $0x8] sm:$0xf]
    %v207 = vld [vmem:[#allocation16 + $0xc] sm:$0xf]
    %v208 = vld [vmem:[#allocation16 + $0x10] sm:$0xf]
    %v209 = vld [vmem:[#allocation16 + $0x14] sm:$0xf]
    %v210 = vld [vmem:[#allocation16 + $0x18] sm:$0xf]
    %v211 = vld [vmem:[#allocation16 + $0x1c] sm:$0xf]
    %v212 = vld [vmem:[#allocation17] sm:$0x1]
    %v213 = vld [vmem:[%s13] sm:$0xf]
    %v214 = vld [vmem:[%s13 + $0x4] sm:$0xf]
    %v215 = vld [vmem:[%s13 + $0x8] sm:$0xf]
    %v216 = vld [vmem:[%s13 + $0xc] sm:$0xf]
    %v217 = vld [vmem:[%s13 + $0x10] sm:$0xf]
    %v218 = vld [vmem:[%s13 + $0x14] sm:$0xf]
    %v219 = vld [vmem:[%s13 + $0x18] sm:$0xf]
    %v220 = vld [vmem:[%s13 + $0x1c] sm:$0xf]
    %v221 = vld [vmem:[%s13 + $0x20] sm:$0xf]
    %v222 = vld [vmem:[%s13 + $0x24] sm:$0xf]
    %v223 = vld [vmem:[%s13 + $0x28] sm:$0xf]
    %v224 = vld [vmem:[%s13 + $0x2c] sm:$0xf]
    %v225 = vld [vmem:[%s13 + $0x30] sm:$0xf]
    %v226 = vld [vmem:[%s13 + $0x34] sm:$0xf]
    %v227 = vld [vmem:[%s13 + $0x38] sm:$0xf]
    %v228 = vld [vmem:[%s13 + $0x3c] sm:$0xf]
    %v229 = vld [vmem:[%s14] sm:$0x1]
    %v230 = vld [vmem:[%s0] sm:$0x3]
    %v231 = vld [vmem:[%s0 + $0x2] sm:$0x3]
    %v232 = vld [vmem:[%s0 + $0x4] sm:$0x3]
    %v233 = vld [vmem:[%s0 + $0x6] sm:$0x3]
    %v234 = vld [vmem:[%s0 + $0x8] sm:$0x3]
    %v235 = vld [vmem:[%s0 + $0xa] sm:$0x3]
    %v236 = vld [vmem:[%s0 + $0xc] sm:$0x3]
    %v237 = vld [vmem:[%s0 + $0xe] sm:$0x3]
    %v246 = vcombine.low %v230, %v231
    %v247 = vcombine.low %v232, %v233
    %v249 = vunpack.c.l.s4 1983009808
    %v250 = vunpack.c.0.s8 %v249
    %v251 = vlaneseq
    %v252 = vshrl.u32 %v251, 7
    %v253 = vsub.s32 %v250, %v252
    %v254 = vrot.slane %v246, %v253
    %v256 = vunpack.c.l.s4 1983009808
    %v257 = vunpack.c.0.s8 %v256
    %v258 = vlaneseq
    %v259 = vshrl.u32 %v258, 7
    %v260 = vsub.s32 %v257, %v259
    %v261 = vrot.slane %v247, %v260
    %v262 = vcombine.low %v254, %v261
    %v263 = vcombine.low %v234, %v235
    %v264 = vcombine.low %v236, %v237
    %v266 = vunpack.c.l.s4 1983009808
    %v267 = vunpack.c.0.s8 %v266
    %v268 = vlaneseq
    %v269 = vshrl.u32 %v268, 7
    %v270 = vsub.s32 %v267, %v269
    %v271 = vrot.slane %v263, %v270
    %v273 = vunpack.c.l.s4 1983009808
    %v274 = vunpack.c.0.s8 %v273
    %v275 = vlaneseq
    %v276 = vshrl.u32 %v275, 7
    %v277 = vsub.s32 %v274, %v276
    %v278 = vrot.slane %v264, %v277
    %v279 = vcombine.low %v271, %v278
    %v282 = vpack.c.bf16 %v279, %v262
    %v284 = vlaneseq
    %v285 = vshrl.u32 %v284, 7
    %v286 = vsub.s32 0, %v285
    %v287 = vrot.slane %v177, %v286
    %vm289 = vcmask 31744
    %v291 = vsel %vm289, %v282, 0
    %vm293 = vcmask 1041408
    %v295 = vsel %vm293, %v176, 0
    %297 = vmatprep.subr.bf16.mxu0 0
    %298 = vmatpush1.bf16.msra.mxu0 %v295
    %299 = vmatprep.subr.bf16.mxu0 0
    %300 = vmatpush1.bf16.msra.mxu0 0
    %301 = vmatprep.subr.bf16.mxu0 0
    %302 = vmatpush1.bf16.msra.mxu0 0
    %303 = vmatprep.subr.bf16.mxu0 0
    %304 = vmatpush1.bf16.msra.mxu0 0
    %305 = vmatprep.subr.bf16.mxu0 0
    %306 = vmatpush1.bf16.msra.mxu0 0
    %307 = vmatprep.subr.bf16.mxu0 0
    %308 = vmatpush1.bf16.msra.mxu0 0
    %309 = vmatprep.subr.bf16.mxu0 0
    %310 = vmatpush1.bf16.msra.mxu0 0
    %311 = vmatprep.subr.bf16.mxu0 0
    %312 = vmatpush1.bf16.msra.mxu0 0
    %313 = vmatprep.subr.bf16.mxu0 0
    %314 = vmatpush1.bf16.msra.mxu0 0
    %315 = vmatprep.subr.bf16.mxu0 0
    %316 = vmatpush1.bf16.msra.mxu0 0
    %317 = vmatprep.subr.bf16.mxu0 0
    %318 = vmatpush1.bf16.msra.mxu0 0
    %319 = vmatprep.subr.bf16.mxu0 0
    %320 = vmatpush1.bf16.msra.mxu0 0
    %321 = vmatprep.subr.bf16.mxu0 0
    %322 = vmatpush1.bf16.msra.mxu0 0
    %323 = vmatprep.subr.bf16.mxu0 0
    %324 = vmatpush1.bf16.msra.mxu0 0
    %325 = vmatprep.subr.bf16.mxu0 0
    %326 = vmatpush1.bf16.msra.mxu0 0
    %327 = vmatprep.subr.bf16.mxu0 0
    %328 = vmatpush1.bf16.msra.mxu0 0
    %329 = vmatprep.mubr.bf16.mxu0 0
    %330 = vmatmul.mubr.bf16.gmra.mrb[0].mxu0 %v291
    %v331 = vpop.f32.mrb[0].mxu0
    %v332 = vadd.f32 %v287, %v331
    %v333 = vpop.f32.mrb[0].mxu0
    %v334 = vpop.f32.mrb[0].mxu0
    %v335 = vadd.f32 %v287, %v334
    %v336 = vpop.f32.mrb[0].mxu0
    %337 = vdwg.mxu0
    %v338 = vmax.f32 %v332, 0.0
    %v339 = vmax.f32 %v335, 0.0
    %v340 = vpack.c.bf16 %v339, %v338
    %v342 = vlaneseq
    %v343 = vshrl.u32 %v342, 7
    %v344 = vsub.s32 0, %v343
    %v345 = vrot.slane %v180, %v344
    %v349 = vunpack.c.l.b16 %v178
    %v350 = vunpack.c.l.b16 %v179
    %v351 = vpack.c.b16 %v350, %v349
    %vm353 = vcmask 130048
    %v355 = vsel %vm353, %v340, 0
    %357 = vmatprep.subr.bf16.mxu0 0
    %358 = vmatpush1.bf16.msra.mxu0 %v351
    %359 = vmatprep.subr.bf16.mxu0 0
    %360 = vmatpush1.bf16.msra.mxu0 0
    %361 = vmatprep.subr.bf16.mxu0 0
    %362 = vmatpush1.bf16.msra.mxu0 0
    %363 = vmatprep.subr.bf16.mxu0 0
    %364 = vmatpush1.bf16.msra.mxu0 0
    %365 = vmatprep.subr.bf16.mxu0 0
    %366 = vmatpush1.bf16.msra.mxu0 0
    %367 = vmatprep.subr.bf16.mxu0 0
    %368 = vmatpush1.bf16.msra.mxu0 0
    %369 = vmatprep.subr.bf16.mxu0 0
    %370 = vmatpush1.bf16.msra.mxu0 0
    %371 = vmatprep.subr.bf16.mxu0 0
    %372 = vmatpush1.bf16.msra.mxu0 0
    %373 = vmatprep.subr.bf16.mxu0 0
    %374 = vmatpush1.bf16.msra.mxu0 0
    %375 = vmatprep.subr.bf16.mxu0 0
    %376 = vmatpush1.bf16.msra.mxu0 0
    %377 = vmatprep.subr.bf16.mxu0 0
    %378 = vmatpush1.bf16.msra.mxu0 0
    %379 = vmatprep.subr.bf16.mxu0 0
    %380 = vmatpush1.bf16.msra.mxu0 0
    %381 = vmatprep.subr.bf16.mxu0 0
    %382 = vmatpush1.bf16.msra.mxu0 0
    %383 = vmatprep.subr.bf16.mxu0 0
    %384 = vmatpush1.bf16.msra.mxu0 0
    %385 = vmatprep.subr.bf16.mxu0 0
    %386 = vmatpush1.bf16.msra.mxu0 0
    %387 = vmatprep.subr.bf16.mxu0 0
    %388 = vmatpush1.bf16.msra.mxu0 0
    %389 = vmatprep.mubr.bf16.mxu0 0
    %390 = vmatmul.mubr.bf16.gmra.mrb[0].mxu0 %v355
    %v391 = vpop.f32.mrb[0].mxu0
    %v392 = vadd.f32 %v345, %v391
    %v393 = vpop.f32.mrb[0].mxu0
    %v394 = vpop.f32.mrb[0].mxu0
    %v395 = vadd.f32 %v345, %v394
    %v396 = vpop.f32.mrb[0].mxu0
    %397 = vdwg.mxu0
    %v398 = vmax.f32 %v392, 0.0
    %v399 = vmax.f32 %v395, 0.0
    %v400 = vpack.c.bf16 %v399, %v398
    %v402 = vlaneseq
    %v403 = vshrl.u32 %v402, 7
    %v404 = vsub.s32 0, %v403
    %v405 = vrot.slane %v185, %v404
    %v411 = vunpack.c.l.b16 %v181
    %v412 = vunpack.c.l.b16 %v182
    %v413 = vunpack.c.l.b16 %v183
    %v414 = vunpack.c.l.b16 %v184
    %v415 = vpack.c.b16 %v412, %v411
    %v416 = vpack.c.b16 %v414, %v413
    %vm419 = vcmask 261120
    %v421 = vsel %vm419, %v400, 0
    %423 = vmatprep.subr.bf16.mxu0 0
    %424 = vmatpush1.bf16.msra.mxu0 %v415
    %425 = vmatprep.subr.bf16.mxu0 0
    %426 = vmatpush1.bf16.msra.mxu0 %v416
    %427 = vmatprep.subr.bf16.mxu0 0
    %428 = vmatpush1.bf16.msra.mxu0 0
    %429 = vmatprep.subr.bf16.mxu0 0
    %430 = vmatpush1.bf16.msra.mxu0 0
    %431 = vmatprep.subr.bf16.mxu0 0
    %432 = vmatpush1.bf16.msra.mxu0 0
    %433 = vmatprep.subr.bf16.mxu0 0
    %434 = vmatpush1.bf16.msra.mxu0 0
    %435 = vmatprep.subr.bf16.mxu0 0
    %436 = vmatpush1.bf16.msra.mxu0 0
    %437 = vmatprep.subr.bf16.mxu0 0
    %438 = vmatpush1.bf16.msra.mxu0 0
    %439 = vmatprep.subr.bf16.mxu0 0
    %440 = vmatpush1.bf16.msra.mxu0 0
    %441 = vmatprep.subr.bf16.mxu0 0
    %442 = vmatpush1.bf16.msra.mxu0 0
    %443 = vmatprep.subr.bf16.mxu0 0
    %444 = vmatpush1.bf16.msra.mxu0 0
    %445 = vmatprep.subr.bf16.mxu0 0
    %446 = vmatpush1.bf16.msra.mxu0 0
    %447 = vmatprep.subr.bf16.mxu0 0
    %448 = vmatpush1.bf16.msra.mxu0 0
    %449 = vmatprep.subr.bf16.mxu0 0
    %450 = vmatpush1.bf16.msra.mxu0 0
    %451 = vmatprep.subr.bf16.mxu0 0
    %452 = vmatpush1.bf16.msra.mxu0 0
    %453 = vmatprep.subr.bf16.mxu0 0
    %454 = vmatpush1.bf16.msra.mxu0 0
    %455 = vmatprep.mubr.bf16.mxu0 0
    %456 = vmatmul.mubr.bf16.gmra.mrb[0].mxu0 %v421
    %v457 = vpop.f32.mrb[0].mxu0
    %v458 = vadd.f32 %v405, %v457
    %v459 = vpop.f32.mrb[0].mxu0
    %v460 = vpop.f32.mrb[0].mxu0
    %v461 = vadd.f32 %v405, %v460
    %v462 = vpop.f32.mrb[0].mxu0
    %463 = vdwg.mxu0
    %v464 = vpack.c.bf16 %v461, %v458
    %v466 = vlaneseq
    %v467 = vshrl.u32 %v466, 7
    %v468 = vsub.s32 0, %v467
    %v469 = vrot.slane %v194, %v468
    %v470 = vlaneseq
    %v471 = vshrl.u32 %v470, 7
    %v472 = vsub.s32 1, %v471
    %v473 = vrot.slane %v194, %v472
    %v484 = vunpack.c.l.b16 %v186
    %v485 = vunpack.c.h.b16 %v186
    %v486 = vunpack.c.l.b16 %v187
    %v487 = vunpack.c.h.b16 %v187
    %v488 = vunpack.c.l.b16 %v188
    %v489 = vunpack.c.h.b16 %v188
    %v490 = vunpack.c.l.b16 %v189
    %v491 = vunpack.c.h.b16 %v189
    %v492 = vunpack.c.l.b16 %v190
    %v493 = vunpack.c.h.b16 %v190
    %v494 = vunpack.c.l.b16 %v191
    %v495 = vunpack.c.h.b16 %v191
    %v496 = vunpack.c.l.b16 %v192
    %v497 = vunpack.c.h.b16 %v192
    %v498 = vunpack.c.l.b16 %v193
    %v499 = vunpack.c.h.b16 %v193
    %v500 = vpack.c.b16 %v486, %v484
    %v501 = vpack.c.b16 %v487, %v485
    %v502 = vpack.c.b16 %v490, %v488
    %v503 = vpack.c.b16 %v491, %v489
    %v504 = vpack.c.b16 %v494, %v492
    %v505 = vpack.c.b16 %v495, %v493
    %v506 = vpack.c.b16 %v498, %v496
    %v507 = vpack.c.b16 %v499, %v497
    %vm516 = vcmask 523264
    %v518 = vsel %vm516, %v464, 0
    %520 = vmatprep.subr.bf16.mxu0 %v501
    %521 = vmatpush1.bf16.msra.mxu0 %v500
    %522 = vmatprep.subr.bf16.mxu0 %v503
    %523 = vmatpush1.bf16.msra.mxu0 %v502
    %524 = vmatprep.subr.bf16.mxu0 %v505
    %525 = vmatpush1.bf16.msra.mxu0 %v504
    %526 = vmatprep.subr.bf16.mxu0 %v507
    %527 = vmatpush1.bf16.msra.mxu0 %v506
    %528 = vmatprep.subr.bf16.mxu0 0
    %529 = vmatpush1.bf16.msra.mxu0 0
    %530 = vmatprep.subr.bf16.mxu0 0
    %531 = vmatpush1.bf16.msra.mxu0 0
    %532 = vmatprep.subr.bf16.mxu0 0
    %533 = vmatpush1.bf16.msra.mxu0 0
    %534 = vmatprep.subr.bf16.mxu0 0
    %535 = vmatpush1.bf16.msra.mxu0 0
    %536 = vmatprep.subr.bf16.mxu0 0
    %537 = vmatpush1.bf16.msra.mxu0 0
    %538 = vmatprep.subr.bf16.mxu0 0
    %539 = vmatpush1.bf16.msra.mxu0 0
    %540 = vmatprep.subr.bf16.mxu0 0
    %541 = vmatpush1.bf16.msra.mxu0 0
    %542 = vmatprep.subr.bf16.mxu0 0
    %543 = vmatpush1.bf16.msra.mxu0 0
    %544 = vmatprep.subr.bf16.mxu0 0
    %545 = vmatpush1.bf16.msra.mxu0 0
    %546 = vmatprep.subr.bf16.mxu0 0
    %547 = vmatpush1.bf16.msra.mxu0 0
    %548 = vmatprep.subr.bf16.mxu0 0
    %549 = vmatpush1.bf16.msra.mxu0 0
    %550 = vmatprep.subr.bf16.mxu0 0
    %551 = vmatpush1.bf16.msra.mxu0 0
    %552 = vmatprep.mubr.bf16.mxu0 0
    %553 = vmatmul.mubr.bf16.gmra.mrb[0].mxu0 %v518
    %v554 = vpop.f32.mrb[0].mxu0
    %v555 = vadd.f32 %v469, %v554
    %v556 = vpop.f32.mrb[0].mxu0
    %v557 = vadd.f32 %v473, %v556
    %v558 = vpop.f32.mrb[0].mxu0
    %v559 = vadd.f32 %v469, %v558
    %v560 = vpop.f32.mrb[0].mxu0
    %v561 = vadd.f32 %v473, %v560
    %562 = vdwg.mxu0
    %v571 = vunpack.c.l.b16 %v195
    %v572 = vunpack.c.h.b16 %v195
    %v573 = vunpack.c.l.b16 %v196
    %v574 = vunpack.c.h.b16 %v196
    %v575 = vunpack.c.l.b16 %v197
    %v576 = vunpack.c.h.b16 %v197
    %v577 = vunpack.c.l.b16 %v198
    %v578 = vunpack.c.h.b16 %v198
    %v579 = vunpack.c.l.b16 %v199
    %v580 = vunpack.c.h.b16 %v199
    %v581 = vunpack.c.l.b16 %v200
    %v582 = vunpack.c.h.b16 %v200
    %v583 = vunpack.c.l.b16 %v201
    %v584 = vunpack.c.h.b16 %v201
    %v585 = vunpack.c.l.b16 %v202
    %v586 = vunpack.c.h.b16 %v202
    %v587 = vpack.c.b16 %v573, %v571
    %v588 = vpack.c.b16 %v574, %v572
    %v589 = vpack.c.b16 %v577, %v575
    %v590 = vpack.c.b16 %v578, %v576
    %v591 = vpack.c.b16 %v581, %v579
    %v592 = vpack.c.b16 %v582, %v580
    %v593 = vpack.c.b16 %v585, %v583
    %v594 = vpack.c.b16 %v586, %v584
    %v604 = vsel %vm516, 0, 0
    %606 = vmatprep.subr.bf16.mxu0 %v588
    %607 = vmatpush1.bf16.msra.mxu0 %v587
    %608 = vmatprep.subr.bf16.mxu0 %v590
    %609 = vmatpush1.bf16.msra.mxu0 %v589
    %610 = vmatprep.subr.bf16.mxu0 %v592
    %611 = vmatpush1.bf16.msra.mxu0 %v591
    %612 = vmatprep.subr.bf16.mxu0 %v594
    %613 = vmatpush1.bf16.msra.mxu0 %v593
    %614 = vmatprep.subr.bf16.mxu0 0
    %615 = vmatpush1.bf16.msra.mxu0 0
    %616 = vmatprep.subr.bf16.mxu0 0
    %617 = vmatpush1.bf16.msra.mxu0 0
    %618 = vmatprep.subr.bf16.mxu0 0
    %619 = vmatpush1.bf16.msra.mxu0 0
    %620 = vmatprep.subr.bf16.mxu0 0
    %621 = vmatpush1.bf16.msra.mxu0 0
    %622 = vmatprep.subr.bf16.mxu0 0
    %623 = vmatpush1.bf16.msra.mxu0 0
    %624 = vmatprep.subr.bf16.mxu0 0
    %625 = vmatpush1.bf16.msra.mxu0 0
    %626 = vmatprep.subr.bf16.mxu0 0
    %627 = vmatpush1.bf16.msra.mxu0 0
    %628 = vmatprep.subr.bf16.mxu0 0
    %629 = vmatpush1.bf16.msra.mxu0 0
    %630 = vmatprep.subr.bf16.mxu0 0
    %631 = vmatpush1.bf16.msra.mxu0 0
    %632 = vmatprep.subr.bf16.mxu0 0
    %633 = vmatpush1.bf16.msra.mxu0 0
    %634 = vmatprep.subr.bf16.mxu0 0
    %635 = vmatpush1.bf16.msra.mxu0 0
    %636 = vmatprep.subr.bf16.mxu0 0
    %637 = vmatpush1.bf16.msra.mxu0 0
    %638 = vmatprep.mubr.bf16.mxu0 0
    %639 = vmatmul.mubr.bf16.gmra.mrb[0].mxu0 %v604
    %v640 = vpop.f32.mrb[0].mxu0
    %v641 = vadd.f32 0.0, %v640
    %v642 = vpop.f32.mrb[0].mxu0
    %v643 = vadd.f32 0.0, %v642
    %v644 = vpop.f32.mrb[0].mxu0
    %v645 = vpop.f32.mrb[0].mxu0
    %646 = vdwg.mxu0
    %v647 = vadd.f32 %v555, %v641
    %v648 = vmul.f32 %v647, 0.5
    %v649 = vtanh.pop %v648
    %v650 = vmul.f32 %v649, 0.5
    %v651 = vadd.f32 %v650, 0.5
    %v653 = vlaneseq
    %v654 = vshrl.u32 %v653, 7
    %v655 = vsub.s32 0, %v654
    %v656 = vrot.slane %v203, %v655
    %v658 = vadd.f32 %v643, %v656
    %v659 = vmul.f32 %v651, %v658
    %v660 = vadd.f32 %v557, %v659
    %v661 = vtanh.pop %v660
    %v662 = vsub.f32 1.0, %v651
    %664 = vrot.lane.b32.xlu0 %v661, 64
    %v665 = vpop.permute.xlu0 %664
    %v667 = vmul.f32 %v662, %v665
    %v668 = vmul.f32 %v651, 0.0
    %v669 = vadd.f32 %v667, %v668
    %v670 = vpack.c.bf16 %v669, %v669
    %672 = vrot.lane.b32.xlu0 %v670, 64
    %v673 = vpop.permute.xlu0 %672
    %v675 = vsel %vm516, %v673, 0
    %677 = vmatprep.subr.bf16.mxu0 %v588
    %678 = vmatpush1.bf16.msra.mxu0 %v587
    %679 = vmatprep.subr.bf16.mxu0 %v590
    %680 = vmatpush1.bf16.msra.mxu0 %v589
    %681 = vmatprep.subr.bf16.mxu0 %v592
    %682 = vmatpush1.bf16.msra.mxu0 %v591
    %683 = vmatprep.subr.bf16.mxu0 %v594
    %684 = vmatpush1.bf16.msra.mxu0 %v593
    %685 = vmatprep.subr.bf16.mxu0 0
    %686 = vmatpush1.bf16.msra.mxu0 0
    %687 = vmatprep.subr.bf16.mxu0 0
    %688 = vmatpush1.bf16.msra.mxu0 0
    %689 = vmatprep.subr.bf16.mxu0 0
    %690 = vmatpush1.bf16.msra.mxu0 0
    %691 = vmatprep.subr.bf16.mxu0 0
    %692 = vmatpush1.bf16.msra.mxu0 0
    %693 = vmatprep.subr.bf16.mxu0 0
    %694 = vmatpush1.bf16.msra.mxu0 0
    %695 = vmatprep.subr.bf16.mxu0 0
    %696 = vmatpush1.bf16.msra.mxu0 0
    %697 = vmatprep.subr.bf16.mxu0 0
    %698 = vmatpush1.bf16.msra.mxu0 0
    %699 = vmatprep.subr.bf16.mxu0 0
    %700 = vmatpush1.bf16.msra.mxu0 0
    %701 = vmatprep.subr.bf16.mxu0 0
    %702 = vmatpush1.bf16.msra.mxu0 0
    %703 = vmatprep.subr.bf16.mxu0 0
    %704 = vmatpush1.bf16.msra.mxu0 0
    %705 = vmatprep.subr.bf16.mxu0 0
    %706 = vmatpush1.bf16.msra.mxu0 0
    %707 = vmatprep.subr.bf16.mxu0 0
    %708 = vmatpush1.bf16.msra.mxu0 0
    %709 = vmatprep.mubr.bf16.mxu0 0
    %710 = vmatmul.mubr.bf16.gmra.mrb[0].mxu0 %v675
    %v711 = vpop.f32.mrb[0].mxu0
    %v712 = vadd.f32 0.0, %v711
    %v713 = vpop.f32.mrb[0].mxu0
    %v714 = vadd.f32 0.0, %v713
    %v715 = vpop.f32.mrb[0].mxu0
    %v716 = vpop.f32.mrb[0].mxu0
    %717 = vdwg.mxu0
    %v719 = vrot.slane %v712, 6
    %v721 = vadd.f32 %v555, %v719
    %v722 = vmul.f32 %v721, 0.5
    %v723 = vtanh.pop %v722
    %v724 = vmul.f32 %v723, 0.5
    %v725 = vadd.f32 %v724, 0.5
    %v726 = vadd.f32 %v714, %v656
    %v728 = vrot.slane %v726, 6
    %v730 = vmul.f32 %v725, %v728
    %v731 = vadd.f32 %v557, %v730
    %v732 = vtanh.pop %v731
    %v733 = vsub.f32 1.0, %v725
    %735 = vrot.lane.b32.xlu0 %v732, 64
    %v736 = vpop.permute.xlu0 %735
    %v738 = vmul.f32 %v733, %v736
    %v740 = vrot.slane %v669, 6
    %v742 = vmul.f32 %v725, %v740
    %v743 = vadd.f32 %v738, %v742
    %v744 = vpack.c.bf16 %v743, %v743
    %v746 = vrot.slane %v744, 1
    %747 = vrot.lane.b32.xlu0 %v746, 64
    %v748 = vpop.permute.xlu0 %747
    %v750 = vsel %vm516, %v748, 0
    %752 = vmatprep.subr.bf16.mxu0 %v588
    %753 = vmatpush1.bf16.msra.mxu0 %v587
    %754 = vmatprep.subr.bf16.mxu0 %v590
    %755 = vmatpush1.bf16.msra.mxu0 %v589
    %756 = vmatprep.subr.bf16.mxu0 %v592
    %757 = vmatpush1.bf16.msra.mxu0 %v591
    %758 = vmatprep.subr.bf16.mxu0 %v594
    %759 = vmatpush1.bf16.msra.mxu0 %v593
    %760 = vmatprep.subr.bf16.mxu0 0
    %761 = vmatpush1.bf16.msra.mxu0 0
    %762 = vmatprep.subr.bf16.mxu0 0
    %763 = vmatpush1.bf16.msra.mxu0 0
    %764 = vmatprep.subr.bf16.mxu0 0
    %765 = vmatpush1.bf16.msra.mxu0 0
    %766 = vmatprep.subr.bf16.mxu0 0
    %767 = vmatpush1.bf16.msra.mxu0 0
    %768 = vmatprep.subr.bf16.mxu0 0
    %769 = vmatpush1.bf16.msra.mxu0 0
    %770 = vmatprep.subr.bf16.mxu0 0
    %771 = vmatpush1.bf16.msra.mxu0 0
    %772 = vmatprep.subr.bf16.mxu0 0
    %773 = vmatpush1.bf16.msra.mxu0 0
    %774 = vmatprep.subr.bf16.mxu0 0
    %775 = vmatpush1.bf16.msra.mxu0 0
    %776 = vmatprep.subr.bf16.mxu0 0
    %777 = vmatpush1.bf16.msra.mxu0 0
    %778 = vmatprep.subr.bf16.mxu0 0
    %779 = vmatpush1.bf16.msra.mxu0 0
    %780 = vmatprep.subr.bf16.mxu0 0
    %781 = vmatpush1.bf16.msra.mxu0 0
    %782 = vmatprep.subr.bf16.mxu0 0
    %783 = vmatpush1.bf16.msra.mxu0 0
    %784 = vmatprep.mubr.bf16.mxu0 0
    %785 = vmatmul.mubr.bf16.gmra.mrb[0].mxu0 %v750
    %v786 = vpop.f32.mrb[0].mxu0
    %v787 = vadd.f32 0.0, %v786
    %v788 = vpop.f32.mrb[0].mxu0
    %v789 = vadd.f32 0.0, %v788
    %v790 = vpop.f32.mrb[0].mxu0
    %v791 = vpop.f32.mrb[0].mxu0
    %792 = vdwg.mxu0
    %v794 = vrot.slane %v787, 4
    %v796 = vadd.f32 %v555, %v794
    %v797 = vmul.f32 %v796, 0.5
    %v798 = vtanh.pop %v797
    %v799 = vmul.f32 %v798, 0.5
    %v800 = vadd.f32 %v799, 0.5
    %v801 = vadd.f32 %v789, %v656
    %v803 = vrot.slane %v801, 4
    %v805 = vmul.f32 %v800, %v803
    %v806 = vadd.f32 %v557, %v805
    %v807 = vtanh.pop %v806
    %v808 = vsub.f32 1.0, %v800
    %810 = vrot.lane.b32.xlu0 %v807, 64
    %v811 = vpop.permute.xlu0 %810
    %v813 = vmul.f32 %v808, %v811
    %v815 = vrot.slane %v743, 6
    %v817 = vmul.f32 %v800, %v815
    %v818 = vadd.f32 %v813, %v817
    %v819 = vpack.c.bf16 %v818, %v818
    %v821 = vrot.slane %v819, 2
    %822 = vrot.lane.b32.xlu0 %v821, 64
    %v823 = vpop.permute.xlu0 %822
    %v825 = vsel %vm516, %v823, 0
    %827 = vmatprep.subr.bf16.mxu0 %v588
    %828 = vmatpush1.bf16.msra.mxu0 %v587
    %829 = vmatprep.subr.bf16.mxu0 %v590
    %830 = vmatpush1.bf16.msra.mxu0 %v589
    %831 = vmatprep.subr.bf16.mxu0 %v592
    %832 = vmatpush1.bf16.msra.mxu0 %v591
    %833 = vmatprep.subr.bf16.mxu0 %v594
    %834 = vmatpush1.bf16.msra.mxu0 %v593
    %835 = vmatprep.subr.bf16.mxu0 0
    %836 = vmatpush1.bf16.msra.mxu0 0
    %837 = vmatprep.subr.bf16.mxu0 0
    %838 = vmatpush1.bf16.msra.mxu0 0
    %839 = vmatprep.subr.bf16.mxu0 0
    %840 = vmatpush1.bf16.msra.mxu0 0
    %841 = vmatprep.subr.bf16.mxu0 0
    %842 = vmatpush1.bf16.msra.mxu0 0
    %843 = vmatprep.subr.bf16.mxu0 0
    %844 = vmatpush1.bf16.msra.mxu0 0
    %845 = vmatprep.subr.bf16.mxu0 0
    %846 = vmatpush1.bf16.msra.mxu0 0
    %847 = vmatprep.subr.bf16.mxu0 0
    %848 = vmatpush1.bf16.msra.mxu0 0
    %849 = vmatprep.subr.bf16.mxu0 0
    %850 = vmatpush1.bf16.msra.mxu0 0
    %851 = vmatprep.subr.bf16.mxu0 0
    %852 = vmatpush1.bf16.msra.mxu0 0
    %853 = vmatprep.subr.bf16.mxu0 0
    %854 = vmatpush1.bf16.msra.mxu0 0
    %855 = vmatprep.subr.bf16.mxu0 0
    %856 = vmatpush1.bf16.msra.mxu0 0
    %857 = vmatprep.subr.bf16.mxu0 0
    %858 = vmatpush1.bf16.msra.mxu0 0
    %859 = vmatprep.mubr.bf16.mxu0 0
    %860 = vmatmul.mubr.bf16.gmra.mrb[0].mxu0 %v825
    %v861 = vpop.f32.mrb[0].mxu0
    %v862 = vadd.f32 0.0, %v861
    %v863 = vpop.f32.mrb[0].mxu0
    %v864 = vadd.f32 0.0, %v863
    %v865 = vpop.f32.mrb[0].mxu0
    %v866 = vpop.f32.mrb[0].mxu0
    %867 = vdwg.mxu0
    %v869 = vrot.slane %v862, 2
    %v871 = vadd.f32 %v555, %v869
    %v872 = vmul.f32 %v871, 0.5
    %v873 = vtanh.pop %v872
    %v874 = vmul.f32 %v873, 0.5
    %v875 = vadd.f32 %v874, 0.5
    %v876 = vadd.f32 %v864, %v656
    %v878 = vrot.slane %v876, 2
    %v880 = vmul.f32 %v875, %v878
    %v881 = vadd.f32 %v557, %v880
    %v882 = vtanh.pop %v881
    %v883 = vsub.f32 1.0, %v875
    %885 = vrot.lane.b32.xlu0 %v882, 64
    %v886 = vpop.permute.xlu0 %885
    %v888 = vmul.f32 %v883, %v886
    %v890 = vrot.slane %v818, 6
    %v892 = vmul.f32 %v875, %v890
    %v893 = vadd.f32 %v888, %v892
    %v894 = vpack.c.bf16 %v893, %v893
    %v896 = vrot.slane %v894, 3
    %897 = vrot.lane.b32.xlu0 %v896, 64
    %v898 = vpop.permute.xlu0 %897
    %v900 = vsel %vm516, %v898, 0
    %902 = vmatprep.subr.bf16.mxu0 %v588
    %903 = vmatpush1.bf16.msra.mxu0 %v587
    %904 = vmatprep.subr.bf16.mxu0 %v590
    %905 = vmatpush1.bf16.msra.mxu0 %v589
    %906 = vmatprep.subr.bf16.mxu0 %v592
    %907 = vmatpush1.bf16.msra.mxu0 %v591
    %908 = vmatprep.subr.bf16.mxu0 %v594
    %909 = vmatpush1.bf16.msra.mxu0 %v593
    %910 = vmatprep.subr.bf16.mxu0 0
    %911 = vmatpush1.bf16.msra.mxu0 0
    %912 = vmatprep.subr.bf16.mxu0 0
    %913 = vmatpush1.bf16.msra.mxu0 0
    %914 = vmatprep.subr.bf16.mxu0 0
    %915 = vmatpush1.bf16.msra.mxu0 0
    %916 = vmatprep.subr.bf16.mxu0 0
    %917 = vmatpush1.bf16.msra.mxu0 0
    %918 = vmatprep.subr.bf16.mxu0 0
    %919 = vmatpush1.bf16.msra.mxu0 0
    %920 = vmatprep.subr.bf16.mxu0 0
    %921 = vmatpush1.bf16.msra.mxu0 0
    %922 = vmatprep.subr.bf16.mxu0 0
    %923 = vmatpush1.bf16.msra.mxu0 0
    %924 = vmatprep.subr.bf16.mxu0 0
    %925 = vmatpush1.bf16.msra.mxu0 0
    %926 = vmatprep.subr.bf16.mxu0 0
    %927 = vmatpush1.bf16.msra.mxu0 0
    %928 = vmatprep.subr.bf16.mxu0 0
    %929 = vmatpush1.bf16.msra.mxu0 0
    %930 = vmatprep.subr.bf16.mxu0 0
    %931 = vmatpush1.bf16.msra.mxu0 0
    %932 = vmatprep.subr.bf16.mxu0 0
    %933 = vmatpush1.bf16.msra.mxu0 0
    %934 = vmatprep.mubr.bf16.mxu0 0
    %935 = vmatmul.mubr.bf16.gmra.mrb[0].mxu0 %v900
    %v936 = vpop.f32.mrb[0].mxu0
    %v937 = vadd.f32 0.0, %v936
    %v938 = vpop.f32.mrb[0].mxu0
    %v939 = vadd.f32 0.0, %v938
    %v940 = vpop.f32.mrb[0].mxu0
    %v941 = vpop.f32.mrb[0].mxu0
    %942 = vdwg.mxu0
    %v943 = vadd.f32 %v559, %v937
    %v944 = vmul.f32 %v943, 0.5
    %v945 = vtanh.pop %v944
    %v946 = vmul.f32 %v945, 0.5
    %v947 = vadd.f32 %v946, 0.5
    %v948 = vadd.f32 %v939, %v656
    %v949 = vmul.f32 %v947, %v948
    %v950 = vadd.f32 %v561, %v949
    %v951 = vtanh.pop %v950
    %v952 = vsub.f32 1.0, %v947
    %954 = vrot.lane.b32.xlu0 %v951, 64
    %v955 = vpop.permute.xlu0 %954
    %v957 = vmul.f32 %v952, %v955
    %v959 = vrot.slane %v893, 6
    %v961 = vmul.f32 %v947, %v959
    %v962 = vadd.f32 %v957, %v961
    %v963 = vpack.c.bf16 %v962, %v962
    %965 = vrot.lane.b32.xlu0 %v963, 64
    %v966 = vpop.permute.xlu0 %965
    %v968 = vsel %vm516, %v966, 0
    %970 = vmatprep.subr.bf16.mxu0 %v588
    %971 = vmatpush1.bf16.msra.mxu0 %v587
    %972 = vmatprep.subr.bf16.mxu0 %v590
    %973 = vmatpush1.bf16.msra.mxu0 %v589
    %974 = vmatprep.subr.bf16.mxu0 %v592
    %975 = vmatpush1.bf16.msra.mxu0 %v591
    %976 = vmatprep.subr.bf16.mxu0 %v594
    %977 = vmatpush1.bf16.msra.mxu0 %v593
    %978 = vmatprep.subr.bf16.mxu0 0
    %979 = vmatpush1.bf16.msra.mxu0 0
    %980 = vmatprep.subr.bf16.mxu0 0
    %981 = vmatpush1.bf16.msra.mxu0 0
    %982 = vmatprep.subr.bf16.mxu0 0
    %983 = vmatpush1.bf16.msra.mxu0 0
    %984 = vmatprep.subr.bf16.mxu0 0
    %985 = vmatpush1.bf16.msra.mxu0 0
    %986 = vmatprep.subr.bf16.mxu0 0
    %987 = vmatpush1.bf16.msra.mxu0 0
    %988 = vmatprep.subr.bf16.mxu0 0
    %989 = vmatpush1.bf16.msra.mxu0 0
    %990 = vmatprep.subr.bf16.mxu0 0
    %991 = vmatpush1.bf16.msra.mxu0 0
    %992 = vmatprep.subr.bf16.mxu0 0
    %993 = vmatpush1.bf16.msra.mxu0 0
    %994 = vmatprep.subr.bf16.mxu0 0
    %995 = vmatpush1.bf16.msra.mxu0 0
    %996 = vmatprep.subr.bf16.mxu0 0
    %997 = vmatpush1.bf16.msra.mxu0 0
    %998 = vmatprep.subr.bf16.mxu0 0
    %999 = vmatpush1.bf16.msra.mxu0 0
    %1000 = vmatprep.subr.bf16.mxu0 0
    %1001 = vmatpush1.bf16.msra.mxu0 0
    %1002 = vmatprep.mubr.bf16.mxu0 0
    %1003 = vmatmul.mubr.bf16.gmra.mrb[0].mxu0 %v968
    %v1004 = vpop.f32.mrb[0].mxu0
    %v1005 = vadd.f32 0.0, %v1004
    %v1006 = vpop.f32.mrb[0].mxu0
    %v1007 = vadd.f32 0.0, %v1006
    %v1008 = vpop.f32.mrb[0].mxu0
    %v1009 = vpop.f32.mrb[0].mxu0
    %1010 = vdwg.mxu0
    %v1012 = vrot.slane %v1005, 6
    %v1014 = vadd.f32 %v559, %v1012
    %v1015 = vmul.f32 %v1014, 0.5
    %v1016 = vtanh.pop %v1015
    %v1017 = vmul.f32 %v1016, 0.5
    %v1018 = vadd.f32 %v1017, 0.5
    %v1019 = vadd.f32 %v1007, %v656
    %v1021 = vrot.slane %v1019, 6
    %v1023 = vmul.f32 %v1018, %v1021
    %v1024 = vadd.f32 %v561, %v1023
    %v1025 = vtanh.pop %v1024
    %v1026 = vsub.f32 1.0, %v1018
    %1028 = vrot.lane.b32.xlu0 %v1025, 64
    %v1029 = vpop.permute.xlu0 %1028
    %v1031 = vmul.f32 %v1026, %v1029
    %v1033 = vrot.slane %v962, 6
    %v1035 = vmul.f32 %v1018, %v1033
    %v1036 = vadd.f32 %v1031, %v1035
    %v1037 = vpack.c.bf16 %v1036, %v1036
    %v1039 = vrot.slane %v1037, 1
    %1040 = vrot.lane.b32.xlu0 %v1039, 64
    %v1041 = vpop.permute.xlu0 %1040
    %v1043 = vsel %vm516, %v1041, 0
    %1045 = vmatprep.subr.bf16.mxu0 %v588
    %1046 = vmatpush1.bf16.msra.mxu0 %v587
    %1047 = vmatprep.subr.bf16.mxu0 %v590
    %1048 = vmatpush1.bf16.msra.mxu0 %v589
    %1049 = vmatprep.subr.bf16.mxu0 %v592
    %1050 = vmatpush1.bf16.msra.mxu0 %v591
    %1051 = vmatprep.subr.bf16.mxu0 %v594
    %1052 = vmatpush1.bf16.msra.mxu0 %v593
    %1053 = vmatprep.subr.bf16.mxu0 0
    %1054 = vmatpush1.bf16.msra.mxu0 0
    %1055 = vmatprep.subr.bf16.mxu0 0
    %1056 = vmatpush1.bf16.msra.mxu0 0
    %1057 = vmatprep.subr.bf16.mxu0 0
    %1058 = vmatpush1.bf16.msra.mxu0 0
    %1059 = vmatprep.subr.bf16.mxu0 0
    %1060 = vmatpush1.bf16.msra.mxu0 0
    %1061 = vmatprep.subr.bf16.mxu0 0
    %1062 = vmatpush1.bf16.msra.mxu0 0
    %1063 = vmatprep.subr.bf16.mxu0 0
    %1064 = vmatpush1.bf16.msra.mxu0 0
    %1065 = vmatprep.subr.bf16.mxu0 0
    %1066 = vmatpush1.bf16.msra.mxu0 0
    %1067 = vmatprep.subr.bf16.mxu0 0
    %1068 = vmatpush1.bf16.msra.mxu0 0
    %1069 = vmatprep.subr.bf16.mxu0 0
    %1070 = vmatpush1.bf16.msra.mxu0 0
    %1071 = vmatprep.subr.bf16.mxu0 0
    %1072 = vmatpush1.bf16.msra.mxu0 0
    %1073 = vmatprep.subr.bf16.mxu0 0
    %1074 = vmatpush1.bf16.msra.mxu0 0
    %1075 = vmatprep.subr.bf16.mxu0 0
    %1076 = vmatpush1.bf16.msra.mxu0 0
    %1077 = vmatprep.mubr.bf16.mxu0 0
    %1078 = vmatmul.mubr.bf16.gmra.mrb[0].mxu0 %v1043
    %v1079 = vpop.f32.mrb[0].mxu0
    %v1080 = vadd.f32 0.0, %v1079
    %v1081 = vpop.f32.mrb[0].mxu0
    %v1082 = vadd.f32 0.0, %v1081
    %v1083 = vpop.f32.mrb[0].mxu0
    %v1084 = vpop.f32.mrb[0].mxu0
    %1085 = vdwg.mxu0
    %v1087 = vrot.slane %v1080, 4
    %v1089 = vadd.f32 %v559, %v1087
    %v1090 = vmul.f32 %v1089, 0.5
    %v1091 = vtanh.pop %v1090
    %v1092 = vmul.f32 %v1091, 0.5
    %v1093 = vadd.f32 %v1092, 0.5
    %v1094 = vadd.f32 %v1082, %v656
    %v1096 = vrot.slane %v1094, 4
    %v1098 = vmul.f32 %v1093, %v1096
    %v1099 = vadd.f32 %v561, %v1098
    %v1100 = vtanh.pop %v1099
    %v1101 = vsub.f32 1.0, %v1093
    %1103 = vrot.lane.b32.xlu0 %v1100, 64
    %v1104 = vpop.permute.xlu0 %1103
    %v1106 = vmul.f32 %v1101, %v1104
    %v1108 = vrot.slane %v1036, 6
    %v1110 = vmul.f32 %v1093, %v1108
    %v1111 = vadd.f32 %v1106, %v1110
    %v1112 = vpack.c.bf16 %v1111, %v1111
    %v1114 = vrot.slane %v1112, 2
    %1115 = vrot.lane.b32.xlu0 %v1114, 64
    %v1116 = vpop.permute.xlu0 %1115
    %v1118 = vsel %vm516, %v1116, 0
    %1120 = vmatprep.subr.bf16.mxu0 %v588
    %1121 = vmatpush1.bf16.msra.mxu0 %v587
    %1122 = vmatprep.subr.bf16.mxu0 %v590
    %1123 = vmatpush1.bf16.msra.mxu0 %v589
    %1124 = vmatprep.subr.bf16.mxu0 %v592
    %1125 = vmatpush1.bf16.msra.mxu0 %v591
    %1126 = vmatprep.subr.bf16.mxu0 %v594
    %1127 = vmatpush1.bf16.msra.mxu0 %v593
    %1128 = vmatprep.subr.bf16.mxu0 0
    %1129 = vmatpush1.bf16.msra.mxu0 0
    %1130 = vmatprep.subr.bf16.mxu0 0
    %1131 = vmatpush1.bf16.msra.mxu0 0
    %1132 = vmatprep.subr.bf16.mxu0 0
    %1133 = vmatpush1.bf16.msra.mxu0 0
    %1134 = vmatprep.subr.bf16.mxu0 0
    %1135 = vmatpush1.bf16.msra.mxu0 0
    %1136 = vmatprep.subr.bf16.mxu0 0
    %1137 = vmatpush1.bf16.msra.mxu0 0
    %1138 = vmatprep.subr.bf16.mxu0 0
    %1139 = vmatpush1.bf16.msra.mxu0 0
    %1140 = vmatprep.subr.bf16.mxu0 0
    %1141 = vmatpush1.bf16.msra.mxu0 0
    %1142 = vmatprep.subr.bf16.mxu0 0
    %1143 = vmatpush1.bf16.msra.mxu0 0
    %1144 = vmatprep.subr.bf16.mxu0 0
    %1145 = vmatpush1.bf16.msra.mxu0 0
    %1146 = vmatprep.subr.bf16.mxu0 0
    %1147 = vmatpush1.bf16.msra.mxu0 0
    %1148 = vmatprep.subr.bf16.mxu0 0
    %1149 = vmatpush1.bf16.msra.mxu0 0
    %1150 = vmatprep.subr.bf16.mxu0 0
    %1151 = vmatpush1.bf16.msra.mxu0 0
    %1152 = vmatprep.mubr.bf16.mxu0 0
    %1153 = vmatmul.mubr.bf16.gmra.mrb[0].mxu0 %v1118
    %v1154 = vpop.f32.mrb[0].mxu0
    %v1155 = vadd.f32 0.0, %v1154
    %v1156 = vpop.f32.mrb[0].mxu0
    %v1157 = vadd.f32 0.0, %v1156
    %v1158 = vpop.f32.mrb[0].mxu0
    %v1159 = vpop.f32.mrb[0].mxu0
    %1160 = vdwg.mxu0
    %v1162 = vrot.slane %v1155, 2
    %v1164 = vadd.f32 %v559, %v1162
    %v1165 = vmul.f32 %v1164, 0.5
    %v1166 = vtanh.pop %v1165
    %v1167 = vmul.f32 %v1166, 0.5
    %v1168 = vadd.f32 %v1167, 0.5
    %v1169 = vadd.f32 %v1157, %v656
    %v1171 = vrot.slane %v1169, 2
    %v1173 = vmul.f32 %v1168, %v1171
    %v1174 = vadd.f32 %v561, %v1173
    %v1175 = vtanh.pop %v1174
    %v1176 = vsub.f32 1.0, %v1168
    %1178 = vrot.lane.b32.xlu0 %v1175, 64
    %v1179 = vpop.permute.xlu0 %1178
    %v1181 = vmul.f32 %v1176, %v1179
    %v1183 = vrot.slane %v1111, 6
    %v1185 = vmul.f32 %v1168, %v1183
    %v1186 = vadd.f32 %v1181, %v1185
    %v1187 = vsel %vm293, %v669, %v743
    %vm1188 = vcmask 1043456
    %v1189 = vsel %vm1188, %v1187, %v818
    %vm1190 = vcmask 1045504
    %v1191 = vsel %vm1190, %v1189, %v893
    %v1192 = vsel %vm293, %v962, %v1036
    %v1193 = vsel %vm1188, %v1192, %v1111
    %v1194 = vsel %vm1190, %v1193, %v1186
    %v1195 = vpack.c.bf16 %v1194, %v1191
    %v1197 = vlaneseq
    %v1198 = vshrl.u32 %v1197, 7
    %v1199 = vsub.s32 0, %v1198
    %v1200 = vrot.slane %v212, %v1199
    %1203 = vrot.lane.b32.xlu0 %v1195, 64
    %v1204 = vpop.permute.xlu0 %1203
    %v1213 = vunpack.c.l.b16 %v204
    %v1214 = vunpack.c.l.b16 %v205
    %v1215 = vunpack.c.l.b16 %v206
    %v1216 = vunpack.c.l.b16 %v207
    %v1217 = vunpack.c.l.b16 %v208
    %v1218 = vunpack.c.l.b16 %v209
    %v1219 = vunpack.c.l.b16 %v210
    %v1220 = vunpack.c.l.b16 %v211
    %v1221 = vpack.c.b16 %v1214, %v1213
    %v1222 = vpack.c.b16 %v1216, %v1215
    %v1223 = vpack.c.b16 %v1218, %v1217
    %v1224 = vpack.c.b16 %v1220, %v1219
    %v1230 = vsel %vm516, %v1204, 0
    %1232 = vmatprep.subr.bf16.mxu0 0
    %1233 = vmatpush1.bf16.msra.mxu0 %v1221
    %1234 = vmatprep.subr.bf16.mxu0 0
    %1235 = vmatpush1.bf16.msra.mxu0 %v1222
    %1236 = vmatprep.subr.bf16.mxu0 0
    %1237 = vmatpush1.bf16.msra.mxu0 %v1223
    %1238 = vmatprep.subr.bf16.mxu0 0
    %1239 = vmatpush1.bf16.msra.mxu0 %v1224
    %1240 = vmatprep.subr.bf16.mxu0 0
    %1241 = vmatpush1.bf16.msra.mxu0 0
    %1242 = vmatprep.subr.bf16.mxu0 0
    %1243 = vmatpush1.bf16.msra.mxu0 0
    %1244 = vmatprep.subr.bf16.mxu0 0
    %1245 = vmatpush1.bf16.msra.mxu0 0
    %1246 = vmatprep.subr.bf16.mxu0 0
    %1247 = vmatpush1.bf16.msra.mxu0 0
    %1248 = vmatprep.subr.bf16.mxu0 0
    %1249 = vmatpush1.bf16.msra.mxu0 0
    %1250 = vmatprep.subr.bf16.mxu0 0
    %1251 = vmatpush1.bf16.msra.mxu0 0
    %1252 = vmatprep.subr.bf16.mxu0 0
    %1253 = vmatpush1.bf16.msra.mxu0 0
    %1254 = vmatprep.subr.bf16.mxu0 0
    %1255 = vmatpush1.bf16.msra.mxu0 0
    %1256 = vmatprep.subr.bf16.mxu0 0
    %1257 = vmatpush1.bf16.msra.mxu0 0
    %1258 = vmatprep.subr.bf16.mxu0 0
    %1259 = vmatpush1.bf16.msra.mxu0 0
    %1260 = vmatprep.subr.bf16.mxu0 0
    %1261 = vmatpush1.bf16.msra.mxu0 0
    %1262 = vmatprep.subr.bf16.mxu0 0
    %1263 = vmatpush1.bf16.msra.mxu0 0
    %1264 = vmatprep.mubr.bf16.mxu0 0
    %1265 = vmatmul.mubr.bf16.gmra.mrb[0].mxu0 %v1230
    %v1266 = vpop.f32.mrb[0].mxu0
    %v1267 = vadd.f32 %v1200, %v1266
    %v1268 = vpop.f32.mrb[0].mxu0
    %v1269 = vpop.f32.mrb[0].mxu0
    %v1270 = vadd.f32 %v1200, %v1269
    %v1271 = vpop.f32.mrb[0].mxu0
    %1272 = vdwg.mxu0
    %v1273 = vmax.f32 %v1267, 0.0
    %v1274 = vmax.f32 %v1270, 0.0
    %v1275 = vpack.c.bf16 %v1274, %v1273
    %v1277 = vlaneseq
    %v1278 = vshrl.u32 %v1277, 7
    %v1279 = vsub.s32 0, %v1278
    %v1280 = vrot.slane %v229, %v1279
    %v1298 = vunpack.c.l.b16 %v213
    %v1299 = vunpack.c.l.b16 %v214
    %v1300 = vunpack.c.l.b16 %v215
    %v1301 = vunpack.c.l.b16 %v216
    %v1302 = vunpack.c.l.b16 %v217
    %v1303 = vunpack.c.l.b16 %v218
    %v1304 = vunpack.c.l.b16 %v219
    %v1305 = vunpack.c.l.b16 %v220
    %v1306 = vunpack.c.l.b16 %v221
    %v1307 = vunpack.c.l.b16 %v222
    %v1308 = vunpack.c.l.b16 %v223
    %v1309 = vunpack.c.l.b16 %v224
    %v1310 = vunpack.c.l.b16 %v225
    %v1311 = vunpack.c.l.b16 %v226
    %v1312 = vunpack.c.l.b16 %v227
    %v1313 = vunpack.c.l.b16 %v228
    %v1314 = vpack.c.b16 %v1299, %v1298
    %v1315 = vpack.c.b16 %v1301, %v1300
    %v1316 = vpack.c.b16 %v1303, %v1302
    %v1317 = vpack.c.b16 %v1305, %v1304
    %v1318 = vpack.c.b16 %v1307, %v1306
    %v1319 = vpack.c.b16 %v1309, %v1308
    %v1320 = vpack.c.b16 %v1311, %v1310
    %v1321 = vpack.c.b16 %v1313, %v1312
    %1330 = vmatprep.subr.bf16.mxu0 0
    %1331 = vmatpush1.bf16.msra.mxu0 %v1314
    %1332 = vmatprep.subr.bf16.mxu0 0
    %1333 = vmatpush1.bf16.msra.mxu0 %v1315
    %1334 = vmatprep.subr.bf16.mxu0 0
    %1335 = vmatpush1.bf16.msra.mxu0 %v1316
    %1336 = vmatprep.subr.bf16.mxu0 0
    %1337 = vmatpush1.bf16.msra.mxu0 %v1317
    %1338 = vmatprep.subr.bf16.mxu0 0
    %1339 = vmatpush1.bf16.msra.mxu0 %v1318
    %1340 = vmatprep.subr.bf16.mxu0 0
    %1341 = vmatpush1.bf16.msra.mxu0 %v1319
    %1342 = vmatprep.subr.bf16.mxu0 0
    %1343 = vmatpush1.bf16.msra.mxu0 %v1320
    %1344 = vmatprep.subr.bf16.mxu0 0
    %1345 = vmatpush1.bf16.msra.mxu0 %v1321
    %1346 = vmatprep.subr.bf16.mxu0 0
    %1347 = vmatpush1.bf16.msra.mxu0 0
    %1348 = vmatprep.subr.bf16.mxu0 0
    %1349 = vmatpush1.bf16.msra.mxu0 0
    %1350 = vmatprep.subr.bf16.mxu0 0
    %1351 = vmatpush1.bf16.msra.mxu0 0
    %1352 = vmatprep.subr.bf16.mxu0 0
    %1353 = vmatpush1.bf16.msra.mxu0 0
    %1354 = vmatprep.subr.bf16.mxu0 0
    %1355 = vmatpush1.bf16.msra.mxu0 0
    %1356 = vmatprep.subr.bf16.mxu0 0
    %1357 = vmatpush1.bf16.msra.mxu0 0
    %1358 = vmatprep.subr.bf16.mxu0 0
    %1359 = vmatpush1.bf16.msra.mxu0 0
    %1360 = vmatprep.subr.bf16.mxu0 0
    %1361 = vmatpush1.bf16.msra.mxu0 0
    %1362 = vmatprep.mubr.bf16.mxu0 0
    %1363 = vmatmul.mubr.bf16.gmra.mrb[0].mxu0 %v1275
    %v1364 = vpop.f32.mrb[0].mxu0
    %v1365 = vadd.f32 %v1280, %v1364
    %v1366 = vpop.f32.mrb[0].mxu0
    %v1367 = vpop.f32.mrb[0].mxu0
    %v1368 = vadd.f32 %v1280, %v1367
    %v1369 = vpop.f32.mrb[0].mxu0
    %1370 = vdwg.mxu0
    %v1372 = vrot.slane %v1365, 2
    %v1373 = vrot.slane %v1365, 4
    %v1374 = vrot.slane %v1365, 6
    %v1376 = vrot.slane %v1368, 2
    %v1377 = vrot.slane %v1368, 4
    %v1378 = vrot.slane %v1368, 6
    %v1379 = vcombine.low %v1365, %v1372
    %v1380 = vcombine.low %v1373, %v1374
    %v1382 = vunpack.c.l.s4 1983009808
    %v1383 = vunpack.c.0.s8 %v1382
    %v1384 = vlaneseq
    %v1385 = vshrl.u32 %v1384, 7
    %v1386 = vsub.s32 %v1383, %v1385
    %v1387 = vrot.slane %v1379, %v1386
    %v1389 = vunpack.c.l.s4 1983009808
    %v1390 = vunpack.c.0.s8 %v1389
    %v1391 = vlaneseq
    %v1392 = vshrl.u32 %v1391, 7
    %v1393 = vsub.s32 %v1390, %v1392
    %v1394 = vrot.slane %v1380, %v1393
    %v1395 = vcombine.low %v1387, %v1394
    %v1396 = vcombine.low %v1368, %v1376
    %v1397 = vcombine.low %v1377, %v1378
    %v1399 = vunpack.c.l.s4 1983009808
    %v1400 = vunpack.c.0.s8 %v1399
    %v1401 = vlaneseq
    %v1402 = vshrl.u32 %v1401, 7
    %v1403 = vsub.s32 %v1400, %v1402
    %v1404 = vrot.slane %v1396, %v1403
    %v1406 = vunpack.c.l.s4 1983009808
    %v1407 = vunpack.c.0.s8 %v1406
    %v1408 = vlaneseq
    %v1409 = vshrl.u32 %v1408, 7
    %v1410 = vsub.s32 %v1407, %v1409
    %v1411 = vrot.slane %v1397, %v1410
    %v1412 = vcombine.low %v1404, %v1411
    %1415 = vst [vmem:[#allocation19] sm:$0xff] %v1395
    %1416 = vst [vmem:[#allocation19 + $0x8] sm:$0xff] %v1412
    // Predicated region
    $region102: #{tpu_custom_call.1} parent=1 // pred_check
      _
    $region103: #{tpu_custom_call.1} parent=1 // pred_check_branch
      %1418 = sbr.rel (0) target = $region105
    $region104: #{tpu_custom_call.1} parent=1 // pred_region
      %s1420 = ssub.s32 256, 256
      %1421 = vsyncadd [#allocation4], %s1420
      %s1423 = sshll.u32 [#allocation19], 4
      %s1424 = int_to_ptr.vmem [resolvable:$true] %s1423
      %1426 = dma.vmem_to_hbm [thread:$0]  %s1424, 256, %s15, [#allocation4]
    $region105: #{tpu_custom_call.1} parent=1 // pred_fallthru
      _
    // Predicated region
    $region106: #{tpu_custom_call.1} parent=1 // pred_check
      _
    $region107: #{tpu_custom_call.1} parent=1 // pred_check_branch
      %1428 = sbr.rel (0) target = $region109
    $region108: #{tpu_custom_call.1} parent=1 // pred_region
      %1429 = dma.done [#allocation4], 256
    $region109: #{tpu_custom_call.1} parent=1 // pred_fallthru
      _
    %1430 = vsyncpa [#allocation3], 1
    %1431 = vsyncpa [#allocation6], 1
    %1432 = vsyncpa [#allocation9], 1
    %1433 = vsyncpa [#allocation12], 1
    %1434 = vsyncpa [#allocation15], 1
    %1435 = vsyncpa [#allocation18], 1
    %1436 = vsyncpa [#allocation4], 1

</llo_original>
